<compile_context>
chip_gen: v5e
topology: v5e:2x2
jax: 0.10.0
libtpu: 0.0.40
codegen_flags: <defaults>
</compile_context>

<pallas_src>
import functools

import jax
import jax.numpy as jnp
import numpy as np
from jax.experimental import pallas as pl
from jax.experimental.pallas import tpu as pltpu


def _fused_conv_kernel(p_ref, w1_ref, b1_ref, w2_ref, b2_ref, o_ref,
                       y_ref, z_ref, *, kh, kw, w1_out, n1, y_rows, blk_b):
    """Fused Conv2d(3,64,3) -> Conv2d(64,64,3) for one batch block.

    p_ref : (1, blk_b*y_rows, 32)        zero-padded im2col patches of the input
    w1_ref: (32, c_mid)                  conv1 weights, K zero-padded 27->32
    b1_ref: (1, c_mid)
    w2_ref: (kh*kw*c_mid, c_out)         conv2 weights, tap-major deep-K layout
    b2_ref: (1, c_out)
    o_ref : (1, n1, blk_b*c_out)         valid conv2 rows, elements lane-packed
    y_ref : (blk_b*y_rows + extra, c_mid) VMEM scratch: conv1 output + safety tail
    z_ref : (blk_b*y_rows, kh*kw*c_mid)  VMEM scratch: conv2 im2col
    """
    f32 = jnp.float32
    c_mid = w1_ref.shape[-1]
    rows = blk_b * y_rows
    extra = y_ref.shape[0] - rows

    # One-time zero of the shifted-read overrun tail (scratch persists across
    # grid steps).  Hygiene only: rows that read this tail are garbage rows the
    # wrapper discards, so correctness never depends on this init (safe even if
    # a v7x core other than the one running step 0 never executes it).
    @pl.when(pl.program_id(0) == 0)
    def _():
        y_ref[pl.ds(rows, extra), :] = jnp.zeros((extra, c_mid), f32)

    # ---- conv1: ONE (rows, 32) @ (32, 64) MXU matmul for the whole block ----
    y_ref[pl.ds(0, rows), :] = (
        jnp.dot(p_ref[0], w1_ref[...], preferred_element_type=f32)
        + b1_ref[0].astype(f32))

    # ---- conv2 im2col: 9 shifted copies of the conv1 slab ----
    # z[r, t*64:(t+1)*64] = y[r + i*W1 + j] for tap t = i*kw + j.  Sublane
    # shifts are free; the lane-offset column stores are cheap masked stores.
    for t in range(kh * kw):
        i, j = divmod(t, kw)
        s = i * w1_out + j
        z_ref[:, t * c_mid:(t + 1) * c_mid] = y_ref[pl.ds(s, rows), :]

    # ---- conv2: ONE deep-K matmul (K = 9*64 = 576); no register accumulator --
    res = (jnp.dot(z_ref[...], w2_ref[...], preferred_element_type=f32)
           + b2_ref[0].astype(f32))

    # ---- lane-dense output: pack the blk_b elements along the lane dim -------
    pieces = [res[b * y_rows:b * y_rows + n1, :] for b in range(blk_b)]
    packed = pieces[0] if blk_b == 1 else jnp.concatenate(pieces, axis=-1)
    o_ref[0] = packed.astype(o_ref.dtype)


def _im2col(x_nhwc, kh, kw):
    """(N,H,W,C) -> (N, H_out*W_out, kh*kw*C), tap-major (i, j, c) columns."""
    n, h, w, c = x_nhwc.shape
    ho, wo = h - kh + 1, w - kw + 1
    cols = [x_nhwc[:, i:i + ho, j:j + wo, :]
            for i in range(kh) for j in range(kw)]
    patches = jnp.concatenate(cols, axis=-1)            # (n, ho, wo, kh*kw*c)
    return patches.reshape(n, ho * wo, kh * kw * c)


def _pick_block(n):
    """Batch elements per grid step; keep >= 2 grid steps so both v7x TCs work."""
    if n <= 1:
        return 1, 1
    blk = min(pl.cdiv(n, 2), 8)          # 8-elem cap keeps VMEM ~5 MiB / step
    return blk, pl.cdiv(n, blk)


def mynet_fused(x_nhwc, w1, b1, w2, b2):
    """x_nhwc: (N,H,W,3); w1: (3,3,3,64) HWIO; w2: (3,3,64,64) HWIO."""
    n, h, w, c_in = x_nhwc.shape
    kh, kw, _, c_mid = w1.shape
    c_out = w2.shape[-1]
    h1, w1_out = h - kh + 1, w - kw + 1            # conv1 output spatial (14,14)
    h2, w2_out = h1 - kh + 1, w1_out - kw + 1      # conv2 output spatial (12,12)
    n1 = h1 * w1_out                               # 196 flat conv1 positions
    y_rows = ((n1 + 7) // 8) * 8                   # 200: 8-aligned element slab
    max_shift = (kh - 1) * w1_out + (kw - 1)       # 30
    extra = ((max_shift + 7) // 8) * 8             # 32 safety rows for tap reads
    k1 = kh * kw * c_in                            # 27
    k1_pad = ((k1 + 7) // 8) * 8                   # 32: aligned patch rows
    k2 = kh * kw * c_mid                           # 576: conv2 deep-K

    blk_b, num_blocks = _pick_block(n)
    n_pad = blk_b * num_blocks

    patches = _im2col(x_nhwc, kh, kw)              # (n, 196, 27)
    patches = jnp.pad(patches,
                      ((0, n_pad - n), (0, y_rows - n1), (0, k1_pad - k1)))
    patches = patches.reshape(num_blocks, blk_b * y_rows, k1_pad)

    w1_mat = jnp.pad(w1.reshape(k1, c_mid), ((0, k1_pad - k1), (0, 0)))
    w2_mat = w2.reshape(k2, c_out)                 # tap-major deep-K layout
    b1_2d = b1.reshape(1, c_mid)
    b2_2d = b2.reshape(1, c_out)

    kernel = functools.partial(_fused_conv_kernel, kh=kh, kw=kw, w1_out=w1_out,
                               n1=n1, y_rows=y_rows, blk_b=blk_b)

    out_flat = pl.pallas_call(
        kernel,
        out_shape=jax.ShapeDtypeStruct((num_blocks, n1, blk_b * c_out),
                                       x_nhwc.dtype),
        grid_spec=pltpu.PrefetchScalarGridSpec(
            num_scalar_prefetch=0,
            grid=(num_blocks,),
            in_specs=[
                pl.BlockSpec((1, blk_b * y_rows, k1_pad), lambda b: (b, 0, 0)),
                pl.BlockSpec((k1_pad, c_mid), lambda b: (0, 0)),
                pl.BlockSpec((1, c_mid), lambda b: (0, 0)),
                pl.BlockSpec((k2, c_out), lambda b: (0, 0)),
                pl.BlockSpec((1, c_out), lambda b: (0, 0)),
            ],
            out_specs=pl.BlockSpec((1, n1, blk_b * c_out), lambda b: (b, 0, 0)),
            scratch_shapes=[
                pltpu.VMEM((blk_b * y_rows + extra, c_mid), jnp.float32),
                pltpu.VMEM((blk_b * y_rows, k2), jnp.float32),
            ],
        ),
        compiler_params=pltpu.CompilerParams(
            dimension_semantics=("parallel",)),
    )(patches, w1_mat, b1_2d, w2_mat, b2_2d)

    # Un-interleave the lane-packed elements, slice valid window (XLA plumbing).
    out = out_flat.reshape(num_blocks, n1, blk_b, c_out)
    out = out.transpose(0, 2, 1, 3).reshape(n_pad, n1, c_out)[:n]
    out = out.reshape(n, h1, w1_out, c_out)[:, :h2, :w2_out, :]
    return out


def init_params(key):
    """Deterministic synthetic params matching nn.Conv2d(3,64,3), nn.Conv2d(64,64,3).

    PyTorch weights are OIHW; we store them as (KH, KW, C_in, C_out) = HWIO.
    """
    k1, k2, k3, k4 = jax.random.split(key, 4)
    fan1 = 3 * 3 * 3
    w1 = jax.random.uniform(k1, (3, 3, 3, 64), jnp.float32,
                            -1.0 / np.sqrt(fan1), 1.0 / np.sqrt(fan1))
    b1 = jax.random.uniform(k2, (64,), jnp.float32,
                            -1.0 / np.sqrt(fan1), 1.0 / np.sqrt(fan1))
    fan2 = 64 * 3 * 3
    w2 = jax.random.uniform(k3, (3, 3, 64, 64), jnp.float32,
                            -1.0 / np.sqrt(fan2), 1.0 / np.sqrt(fan2))
    b2 = jax.random.uniform(k4, (64,), jnp.float32,
                            -1.0 / np.sqrt(fan2), 1.0 / np.sqrt(fan2))
    return (w1, b1), (w2, b2)


@jax.jit
def mynet_forward(x_nchw, w1, b1, w2, b2):
    """MyNet.forward: x -> Conv2d(3,64,3) -> Conv2d(64,64,3). Returns NCHW."""
    x = jnp.transpose(x_nchw, (0, 2, 3, 1))      # NCHW -> NHWC
    y = mynet_fused(x, w1, b1, w2, b2)           # (N, 12, 12, 64)
    return jnp.transpose(y, (0, 3, 1, 2))        # NHWC -> NCHW


def _reference(x_nchw, w1, b1, w2, b2):
    """Pure-JAX reference using lax.conv (NCHW / OIHW), for a sanity check."""
    def conv(x, w_hwio, b):
        w_oihw = jnp.transpose(w_hwio, (3, 2, 0, 1))
        y = jax.lax.conv_general_dilated(
            x, w_oihw, window_strides=(1, 1), padding="VALID",
            dimension_numbers=("NCHW", "OIHW", "NCHW"))
        return y + b[None, :, None, None]
    return conv(conv(x_nchw, w1, b1), w2, b2)


if __name__ == "__main__":
    key = jax.random.PRNGKey(0)
    kx, kp = jax.random.split(key)
    (w1, b1), (w2, b2) = init_params(kp)

    # N=2 -> blk_b=1, grid=(2,): both TensorCores busy on v7x.
    x2 = jax.random.normal(kx, (2, 3, 16, 16), dtype=jnp.float32)
    out2 = jax.block_until_ready(mynet_forward(x2, w1, b1, w2, b2))
    assert out2.shape == (2, 64, 12, 12), out2.shape
    np.testing.assert_allclose(np.asarray(out2),
                               np.asarray(_reference(x2, w1, b1, w2, b2)),
                               rtol=1e-4, atol=1e-4)

    # N=5 -> blk_b=3, grid=(2,): exercises batch blocking, lane-dense packing
    # (192-wide output) and batch padding.
    x5 = jax.random.normal(kx, (5, 3, 16, 16), dtype=jnp.float32)
    out5 = jax.block_until_ready(mynet_forward(x5, w1, b1, w2, b2))
    assert out5.shape == (5, 64, 12, 12), out5.shape
    np.testing.assert_allclose(np.asarray(out5),
                               np.asarray(_reference(x5, w1, b1, w2, b2)),
                               rtol=1e-4, atol=1e-4)

    print("KERNEL_OK")
</pallas_src>

<mosaic_0001>
module attributes {stable_mosaic.version = 11 : i64} {
  func.func @_fused_conv_kernel(%arg0: i32, %arg1: memref<1x200x32xf32, #tpu.memory_space<vmem>>, %arg2: memref<32x64xf32, #tpu.memory_space<vmem>>, %arg3: memref<1x64xf32, #tpu.memory_space<vmem>>, %arg4: memref<576x64xf32, #tpu.memory_space<vmem>>, %arg5: memref<1x64xf32, #tpu.memory_space<vmem>>, %arg6: memref<1x196x64xf32, #tpu.memory_space<vmem>>, %arg7: memref<232x64xf32, #tpu.memory_space<vmem>>, %arg8: memref<200x576xf32, #tpu.memory_space<vmem>>) attributes {dimension_semantics = [#tpu.dimension_semantics<parallel>], iteration_bounds = array<i64: 2>, scalar_prefetch = 0 : i64, scratch_operands = 2 : i64, tpu.core_type = #tpu.core_type<tc>, window_params = [{transform_indices = @transform_0, window_bounds = array<i64: 1, 200, 32>}, {pipeline_mode = #tpu.pipeline_mode<synchronous>, transform_indices = @transform_1, window_bounds = array<i64: 32, 64>}, {pipeline_mode = #tpu.pipeline_mode<synchronous>, transform_indices = @transform_2, window_bounds = array<i64: 1, 64>}, {pipeline_mode = #tpu.pipeline_mode<synchronous>, transform_indices = @transform_3, window_bounds = array<i64: 576, 64>}, {pipeline_mode = #tpu.pipeline_mode<synchronous>, transform_indices = @transform_4, window_bounds = array<i64: 1, 64>}, {transform_indices = @transform_5, window_bounds = array<i64: 1, 196, 64>}]} {
    %c0_i32 = arith.constant 0 : i32
    %0 = arith.cmpi eq, %arg0, %c0_i32 : i32
    %1 = arith.extui %0 : i1 to i32
    %c0_i32_0 = arith.constant 0 : i32
    %2 = arith.cmpi ne, %1, %c0_i32_0 : i32
    scf.if %2 {
      %cst_39 = arith.constant 0.000000e+00 : f32
      %43 = vector.broadcast %cst_39 : f32 to vector<32x64xf32>
      %c200 = arith.constant 200 : index
      %c0_40 = arith.constant 0 : index
      %44 = vector.load %arg7[%c200, %c0_40] : memref<232x64xf32, #tpu.memory_space<vmem>>, vector<32x64xf32>
      tpu.vector_store %arg7[%c200, %c0_40], %43 {strides = array<i32>} : memref<232x64xf32, #tpu.memory_space<vmem>>, vector<32x64xf32>,
    } else {
    }
    %c0 = arith.constant 0 : index
    %c0_1 = arith.constant 0 : index
    %c0_2 = arith.constant 0 : index
    %3 = vector.load %arg1[%c0, %c0_1, %c0_2] : memref<1x200x32xf32, #tpu.memory_space<vmem>>, vector<1x200x32xf32>
    %4 = vector.shape_cast %3 : vector<1x200x32xf32> to vector<200x32xf32>
    %c0_3 = arith.constant 0 : index
    %c0_4 = arith.constant 0 : index
    %5 = vector.load %arg2[%c0_3, %c0_4] : memref<32x64xf32, #tpu.memory_space<vmem>>, vector<32x64xf32>
    %cst = arith.constant dense<0.000000e+00> : vector<200x64xf32>
    %6 = tpu.matmul %4, %5, %cst {dimension_numbers = #tpu.dot_dimension_numbers<[1], [0], [0], [1], [0, 0, 1, 1], [], []>} : vector<200x32xf32>, vector<32x64xf32>, vector<200x64xf32> -> vector<200x64xf32>
    %c0_5 = arith.constant 0 : index
    %c0_6 = arith.constant 0 : index
    %7 = vector.load %arg3[%c0_5, %c0_6] : memref<1x64xf32, #tpu.memory_space<vmem>>, vector<1x64xf32>
    %8 = vector.shape_cast %7 : vector<1x64xf32> to vector<64xf32>
    %9 = vector.shape_cast %8 : vector<64xf32> to vector<1x64xf32>
    %10 = vector.broadcast %9 : vector<1x64xf32> to vector<200x64xf32>
    %11 = arith.addf %6, %10 : vector<200x64xf32>
    %c0_7 = arith.constant 0 : index
    %c0_8 = arith.constant 0 : index
    %12 = vector.load %arg7[%c0_7, %c0_8] : memref<232x64xf32, #tpu.memory_space<vmem>>, vector<200x64xf32>
    tpu.vector_store %arg7[%c0_7, %c0_8], %11 {strides = array<i32>} : memref<232x64xf32, #tpu.memory_space<vmem>>, vector<200x64xf32>,
    %c0_9 = arith.constant 0 : index
    %c0_10 = arith.constant 0 : index
    %13 = vector.load %arg7[%c0_9, %c0_10] : memref<232x64xf32, #tpu.memory_space<vmem>>, vector<200x64xf32>
    %c0_11 = arith.constant 0 : index
    %c0_12 = arith.constant 0 : index
    %14 = vector.load %arg8[%c0_11, %c0_12] : memref<200x576xf32, #tpu.memory_space<vmem>>, vector<200x64xf32>
    tpu.vector_store %arg8[%c0_11, %c0_12], %13 {strides = array<i32>} : memref<200x576xf32, #tpu.memory_space<vmem>>, vector<200x64xf32>,
    %c1 = arith.constant 1 : index
    %c0_13 = arith.constant 0 : index
    %15 = vector.load %arg7[%c1, %c0_13] : memref<232x64xf32, #tpu.memory_space<vmem>>, vector<200x64xf32>
    %c0_14 = arith.constant 0 : index
    %c64 = arith.constant 64 : index
    %16 = vector.load %arg8[%c0_14, %c64] : memref<200x576xf32, #tpu.memory_space<vmem>>, vector<200x64xf32>
    tpu.vector_store %arg8[%c0_14, %c64], %15 {strides = array<i32>} : memref<200x576xf32, #tpu.memory_space<vmem>>, vector<200x64xf32>,
    %c2 = arith.constant 2 : index
    %c0_15 = arith.constant 0 : index
    %17 = vector.load %arg7[%c2, %c0_15] : memref<232x64xf32, #tpu.memory_space<vmem>>, vector<200x64xf32>
    %c0_16 = arith.constant 0 : index
    %c128 = arith.constant 128 : index
    %18 = vector.load %arg8[%c0_16, %c128] : memref<200x576xf32, #tpu.memory_space<vmem>>, vector<200x64xf32>
    tpu.vector_store %arg8[%c0_16, %c128], %17 {strides = array<i32>} : memref<200x576xf32, #tpu.memory_space<vmem>>, vector<200x64xf32>,
    %c14 = arith.constant 14 : index
    %c0_17 = arith.constant 0 : index
    %19 = vector.load %arg7[%c14, %c0_17] : memref<232x64xf32, #tpu.memory_space<vmem>>, vector<200x64xf32>
    %c0_18 = arith.constant 0 : index
    %c192 = arith.constant 192 : index
    %20 = vector.load %arg8[%c0_18, %c192] : memref<200x576xf32, #tpu.memory_space<vmem>>, vector<200x64xf32>
    tpu.vector_store %arg8[%c0_18, %c192], %19 {strides = array<i32>} : memref<200x576xf32, #tpu.memory_space<vmem>>, vector<200x64xf32>,
    %c15 = arith.constant 15 : index
    %c0_19 = arith.constant 0 : index
    %21 = vector.load %arg7[%c15, %c0_19] : memref<232x64xf32, #tpu.memory_space<vmem>>, vector<200x64xf32>
    %c0_20 = arith.constant 0 : index
    %c256 = arith.constant 256 : index
    %22 = vector.load %arg8[%c0_20, %c256] : memref<200x576xf32, #tpu.memory_space<vmem>>, vector<200x64xf32>
    tpu.vector_store %arg8[%c0_20, %c256], %21 {strides = array<i32>} : memref<200x576xf32, #tpu.memory_space<vmem>>, vector<200x64xf32>,
    %c16 = arith.constant 16 : index
    %c0_21 = arith.constant 0 : index
    %23 = vector.load %arg7[%c16, %c0_21] : memref<232x64xf32, #tpu.memory_space<vmem>>, vector<200x64xf32>
    %c0_22 = arith.constant 0 : index
    %c320 = arith.constant 320 : index
    %24 = vector.load %arg8[%c0_22, %c320] : memref<200x576xf32, #tpu.memory_space<vmem>>, vector<200x64xf32>
    tpu.vector_store %arg8[%c0_22, %c320], %23 {strides = array<i32>} : memref<200x576xf32, #tpu.memory_space<vmem>>, vector<200x64xf32>,
    %c28 = arith.constant 28 : index
    %c0_23 = arith.constant 0 : index
    %25 = vector.load %arg7[%c28, %c0_23] : memref<232x64xf32, #tpu.memory_space<vmem>>, vector<200x64xf32>
    %c0_24 = arith.constant 0 : index
    %c384 = arith.constant 384 : index
    %26 = vector.load %arg8[%c0_24, %c384] : memref<200x576xf32, #tpu.memory_space<vmem>>, vector<200x64xf32>
    tpu.vector_store %arg8[%c0_24, %c384], %25 {strides = array<i32>} : memref<200x576xf32, #tpu.memory_space<vmem>>, vector<200x64xf32>,
    %c29 = arith.constant 29 : index
    %c0_25 = arith.constant 0 : index
    %27 = vector.load %arg7[%c29, %c0_25] : memref<232x64xf32, #tpu.memory_space<vmem>>, vector<200x64xf32>
    %c0_26 = arith.constant 0 : index
    %c448 = arith.constant 448 : index
    %28 = vector.load %arg8[%c0_26, %c448] : memref<200x576xf32, #tpu.memory_space<vmem>>, vector<200x64xf32>
    tpu.vector_store %arg8[%c0_26, %c448], %27 {strides = array<i32>} : memref<200x576xf32, #tpu.memory_space<vmem>>, vector<200x64xf32>,
    %c30 = arith.constant 30 : index
    %c0_27 = arith.constant 0 : index
    %29 = vector.load %arg7[%c30, %c0_27] : memref<232x64xf32, #tpu.memory_space<vmem>>, vector<200x64xf32>
    %c0_28 = arith.constant 0 : index
    %c512 = arith.constant 512 : index
    %30 = vector.load %arg8[%c0_28, %c512] : memref<200x576xf32, #tpu.memory_space<vmem>>, vector<200x64xf32>
    tpu.vector_store %arg8[%c0_28, %c512], %29 {strides = array<i32>} : memref<200x576xf32, #tpu.memory_space<vmem>>, vector<200x64xf32>,
    %c0_29 = arith.constant 0 : index
    %c0_30 = arith.constant 0 : index
    %31 = vector.load %arg8[%c0_29, %c0_30] : memref<200x576xf32, #tpu.memory_space<vmem>>, vector<200x576xf32>
    %c0_31 = arith.constant 0 : index
    %c0_32 = arith.constant 0 : index
    %32 = vector.load %arg4[%c0_31, %c0_32] : memref<576x64xf32, #tpu.memory_space<vmem>>, vector<576x64xf32>
    %cst_33 = arith.constant dense<0.000000e+00> : vector<200x64xf32>
    %33 = tpu.matmul %31, %32, %cst_33 {dimension_numbers = #tpu.dot_dimension_numbers<[1], [0], [0], [1], [0, 0, 1, 1], [], []>} : vector<200x576xf32>, vector<576x64xf32>, vector<200x64xf32> -> vector<200x64xf32>
    %c0_34 = arith.constant 0 : index
    %c0_35 = arith.constant 0 : index
    %34 = vector.load %arg5[%c0_34, %c0_35] : memref<1x64xf32, #tpu.memory_space<vmem>>, vector<1x64xf32>
    %35 = vector.shape_cast %34 : vector<1x64xf32> to vector<64xf32>
    %36 = vector.shape_cast %35 : vector<64xf32> to vector<1x64xf32>
    %37 = vector.broadcast %36 : vector<1x64xf32> to vector<200x64xf32>
    %38 = arith.addf %33, %37 : vector<200x64xf32>
    %39 = vector.extract_strided_slice %38 {offsets = [0, 0], sizes = [196, 64], strides = [1, 1]} : vector<200x64xf32> to vector<196x64xf32>
    %c0_36 = arith.constant 0 : index
    %c0_37 = arith.constant 0 : index
    %c0_38 = arith.constant 0 : index
    %40 = vector.load %arg6[%c0_36, %c0_37, %c0_38] : memref<1x196x64xf32, #tpu.memory_space<vmem>>, vector<1x196x64xf32>
    %41 = vector.shape_cast %40 : vector<1x196x64xf32> to vector<196x64xf32>
    %42 = vector.shape_cast %39 : vector<196x64xf32> to vector<1x196x64xf32>
    tpu.vector_store %arg6[%c0_36, %c0_37, %c0_38], %42 {strides = array<i32>} : memref<1x196x64xf32, #tpu.memory_space<vmem>>, vector<1x196x64xf32>,
    return
  }
  func.func @transform_0(%arg0: i32) -> (i32, i32, i32) {
    %c0_i32 = arith.constant 0 : i32
    %c0_i32_0 = arith.constant 0 : i32
    %c0_i32_1 = arith.constant 0 : i32
    return %arg0, %c0_i32, %c0_i32_0 : i32, i32, i32
  }
  func.func @transform_1(%arg0: i32) -> (i32, i32) {
    %c0_i32 = arith.constant 0 : i32
    %c0_i32_0 = arith.constant 0 : i32
    %c0_i32_1 = arith.constant 0 : i32
    return %c0_i32, %c0_i32_0 : i32, i32
  }
  func.func @transform_2(%arg0: i32) -> (i32, i32) {
    %c0_i32 = arith.constant 0 : i32
    %c0_i32_0 = arith.constant 0 : i32
    %c0_i32_1 = arith.constant 0 : i32
    return %c0_i32, %c0_i32_0 : i32, i32
  }
  func.func @transform_3(%arg0: i32) -> (i32, i32) {
    %c0_i32 = arith.constant 0 : i32
    %c0_i32_0 = arith.constant 0 : i32
    %c0_i32_1 = arith.constant 0 : i32
    return %c0_i32, %c0_i32_0 : i32, i32
  }
  func.func @transform_4(%arg0: i32) -> (i32, i32) {
    %c0_i32 = arith.constant 0 : i32
    %c0_i32_0 = arith.constant 0 : i32
    %c0_i32_1 = arith.constant 0 : i32
    return %c0_i32, %c0_i32_0 : i32, i32
  }
  func.func @transform_5(%arg0: i32) -> (i32, i32, i32) {
    %c0_i32 = arith.constant 0 : i32
    %c0_i32_0 = arith.constant 0 : i32
    %c0_i32_1 = arith.constant 0 : i32
    return %arg0, %c0_i32, %c0_i32_0 : i32, i32, i32
  }
}

</mosaic_0001>

<llo_original>
// kernel: mynet_forward.1
$region0: #{mynet_forward.1}
  #allocation0 [shape = 'u32[]', space=smem, size = 0x4, offset = 0x4, fixed_abs, tag = 'smem constant byte address 0x4 - core index']
  #allocation1 [shape = 'u32[72,128]{1,0:T(1,128)}', space=vmem, size = 0x9000, scoped, tag = 'internal scratch']
  #allocation2 [shape = 'f32[232,64]{1,0:T(8,128)}', space=vmem, size = 0x1d000, scoped, tag = 'scratch operand']
  #allocation3 [shape = 'f32[200,576]{1,0:T(8,128)}', space=vmem, size = 0x7d000, scoped, tag = 'scratch operand']
  %s0 = inlined_call_operand.vmem [shape: f32[2,200,32], index: 0, kind: input, shape index: {}]
  %s1 = inlined_call_operand.vmem [shape: f32[32,64], index: 1, kind: input, shape index: {}]
  %s2 = inlined_call_operand.vmem [shape: f32[1,64], index: 2, kind: input, shape index: {}]
  %s3 = inlined_call_operand.vmem [shape: f32[576,64], index: 3, kind: input, shape index: {}]
  %s4 = inlined_call_operand.vmem [shape: f32[1,64], index: 4, kind: input, shape index: {}]
  %s5 = inlined_call_operand.vmem [shape: f32[2,196,64], index: 5, kind: output, shape index: {}]
  %s6 = sld [smem:[#allocation0]]
  $region57: #{mynet_forward.1} parent=0
    _
  %s8 = ssub.s32 1, %s6
  %s9 = scalar_select 0, %s8, %s6
  loop: start=0, step=1, limit=4
  $region2: #{mynet_forward.1} parent=0 // loop_pre_header
    _
  $region3: #{mynet_forward.1} parent=0 // loop_header
    %s11 = sphi 0, %s15
    %p12 = scmp.ge.s32.totalorder %s11, 4
    %s21 = sphi 0, %s23
    %s24 = sphi 0, %s21
    %s25 = sphi 0, %s24
    %s41 = sphi 0, %s25
    %s45 = sphi 0, %s45
    %s47 = sphi 0, %s45
    %s48 = sphi 0, %s47
    %s62 = sphi 0, %s48
    %s66 = sphi 0, %s66
    %s68 = sphi 0, %s66
    %s69 = sphi 0, %s68
    %s83 = sphi 0, %s69
    %s87 = sphi 0, %s87
    %s89 = sphi 0, %s87
    %s90 = sphi 0, %s89
    %s104 = sphi 0, %s90
    %s108 = sphi 0, %s108
    %s110 = sphi 0, %s108
    %s111 = sphi 0, %s110
    %s125 = sphi 0, %s111
    %s131 = sphi 0, %s133
    %s134 = sphi 0, %s131
    %s135 = sphi 0, %s134
    %s151 = sphi 0, %s135
  $region4: #{mynet_forward.1} parent=0 // loop_header_branch
    %14 = sbr.rel (%p12) target = $region8
  $region5: #{mynet_forward.1} parent=0 // loop_body
    %s16 = ssub.s32 %s11, 1
    %s17 = ssub.s32 %s11, 2
    %s18 = sadd.s32 %s11, 1
    %s19 = ssub.s32 %s11, %s18
    %p20 = scmp.eq.s32.totalorder %s19, 0
    %s22 = sadd.s32 %s21, 1
    %s23 = scalar_select %p20, %s21, %s22
    %p26 = pneg %p20
    %p27 = scmp.eq.s32.totalorder %s11, 1
    %p28 = por %p26, %p27
    %p29 = scmp.ne.s32.totalorder %s21, %s24
    %p30 = scmp.eq.s32.totalorder %s11, 0
    %p31 = por %p29, %p30
    %p32 = scmp.ne.s32.totalorder %s21, %s24
    %p33 = scmp.eq.s32.totalorder %s16, 1
    %p34 = por %p32, %p33
    %p35 = scmp.ne.s32.totalorder %s24, %s25
    %p36 = scmp.eq.s32.totalorder %s16, 0
    %p37 = por %p35, %p36
    %p38 = scmp.ne.s32.totalorder %s24, %s25
    %p39 = scmp.eq.s32.totalorder %s17, 1
    %p40 = por %p38, %p39
    %p42 = scmp.ne.s32.totalorder %s25, %s41
    %p43 = scmp.eq.s32.totalorder %s17, 0
    %p44 = por %p42, %p43
    %s46 = sadd.s32 %s45, 1
    %p49 = scmp.eq.s32.totalorder %s11, 1
    %p50 = scmp.ne.s32.totalorder %s45, %s47
    %p51 = scmp.eq.s32.totalorder %s11, 0
    %p52 = por %p50, %p51
    %p53 = scmp.ne.s32.totalorder %s45, %s47
    %p54 = scmp.eq.s32.totalorder %s16, 1
    %p55 = por %p53, %p54
    %p56 = scmp.ne.s32.totalorder %s47, %s48
    %p57 = scmp.eq.s32.totalorder %s16, 0
    %p58 = por %p56, %p57
    %p59 = scmp.ne.s32.totalorder %s47, %s48
    %p60 = scmp.eq.s32.totalorder %s17, 1
    %p61 = por %p59, %p60
    %p63 = scmp.ne.s32.totalorder %s48, %s62
    %p64 = scmp.eq.s32.totalorder %s17, 0
    %p65 = por %p63, %p64
    %s67 = sadd.s32 %s66, 1
    %p70 = scmp.eq.s32.totalorder %s11, 1
    %p71 = scmp.ne.s32.totalorder %s66, %s68
    %p72 = scmp.eq.s32.totalorder %s11, 0
    %p73 = por %p71, %p72
    %p74 = scmp.ne.s32.totalorder %s66, %s68
    %p75 = scmp.eq.s32.totalorder %s16, 1
    %p76 = por %p74, %p75
    %p77 = scmp.ne.s32.totalorder %s68, %s69
    %p78 = scmp.eq.s32.totalorder %s16, 0
    %p79 = por %p77, %p78
    %p80 = scmp.ne.s32.totalorder %s68, %s69
    %p81 = scmp.eq.s32.totalorder %s17, 1
    %p82 = por %p80, %p81
    %p84 = scmp.ne.s32.totalorder %s69, %s83
    %p85 = scmp.eq.s32.totalorder %s17, 0
    %p86 = por %p84, %p85
    %s88 = sadd.s32 %s87, 1
    %p91 = scmp.eq.s32.totalorder %s11, 1
    %p92 = scmp.ne.s32.totalorder %s87, %s89
    %p93 = scmp.eq.s32.totalorder %s11, 0
    %p94 = por %p92, %p93
    %p95 = scmp.ne.s32.totalorder %s87, %s89
    %p96 = scmp.eq.s32.totalorder %s16, 1
    %p97 = por %p95, %p96
    %p98 = scmp.ne.s32.totalorder %s89, %s90
    %p99 = scmp.eq.s32.totalorder %s16, 0
    %p100 = por %p98, %p99
    %p101 = scmp.ne.s32.totalorder %s89, %s90
    %p102 = scmp.eq.s32.totalorder %s17, 1
    %p103 = por %p101, %p102
    %p105 = scmp.ne.s32.totalorder %s90, %s104
    %p106 = scmp.eq.s32.totalorder %s17, 0
    %p107 = por %p105, %p106
    %s109 = sadd.s32 %s108, 1
    %p112 = scmp.eq.s32.totalorder %s11, 1
    %p113 = scmp.ne.s32.totalorder %s108, %s110
    %p114 = scmp.eq.s32.totalorder %s11, 0
    %p115 = por %p113, %p114
    %p116 = scmp.ne.s32.totalorder %s108, %s110
    %p117 = scmp.eq.s32.totalorder %s16, 1
    %p118 = por %p116, %p117
    %p119 = scmp.ne.s32.totalorder %s110, %s111
    %p120 = scmp.eq.s32.totalorder %s16, 0
    %p121 = por %p119, %p120
    %p122 = scmp.ne.s32.totalorder %s110, %s111
    %p123 = scmp.eq.s32.totalorder %s17, 1
    %p124 = por %p122, %p123
    %p126 = scmp.ne.s32.totalorder %s111, %s125
    %p127 = scmp.eq.s32.totalorder %s17, 0
    %p128 = por %p126, %p127
    %s129 = ssub.s32 %s11, %s18
    %p130 = scmp.eq.s32.totalorder %s129, 0
    %s132 = sadd.s32 %s131, 1
    %s133 = scalar_select %p130, %s131, %s132
    %p136 = pneg %p130
    %p137 = scmp.eq.s32.totalorder %s11, 1
    %p138 = por %p136, %p137
    %p139 = scmp.ne.s32.totalorder %s131, %s134
    %p140 = scmp.eq.s32.totalorder %s11, 0
    %p141 = por %p139, %p140
    %p142 = scmp.ne.s32.totalorder %s131, %s134
    %p143 = scmp.eq.s32.totalorder %s16, 1
    %p144 = por %p142, %p143
    %p145 = scmp.ne.s32.totalorder %s134, %s135
    %p146 = scmp.eq.s32.totalorder %s16, 0
    %p147 = por %p145, %p146
    %p148 = scmp.ne.s32.totalorder %s134, %s135
    %p149 = scmp.eq.s32.totalorder %s17, 1
    %p150 = por %p148, %p149
    %p152 = scmp.ne.s32.totalorder %s135, %s151
    %p153 = scmp.eq.s32.totalorder %s17, 0
    %p154 = por %p152, %p153
    %p155 = scmp.le.s32.totalorder 1, %s11
    %p156 = scmp.lt.s32.totalorder %s11, 3
    %p157 = pnand %p155, %p156
    %p158 = pneg %p157
    // Predicated region
    $region9: #{mynet_forward.1} parent=5 // pred_check
      _
    $region10: #{mynet_forward.1} parent=5 // pred_check_branch
      %160 = sbr.rel (%p157) target = $region12
    $region11: #{mynet_forward.1} parent=5 // pred_region
      %s161 = ssub.s32 %s11, 1
      // Predicated region
      $region13: #{mynet_forward.1} parent=11 // pred_check
        %p162 = pneg %p58
      $region14: #{mynet_forward.1} parent=11 // pred_check_branch
        %164 = sbr.rel (%p162) target = $region16
      $region15: #{mynet_forward.1} parent=11 // pred_region
        _
      $region16: #{mynet_forward.1} parent=11 // pred_fallthru
        _
      // Predicated region
      $region17: #{mynet_forward.1} parent=11 // pred_check
        %p165 = pneg %p79
      $region18: #{mynet_forward.1} parent=11 // pred_check_branch
        %167 = sbr.rel (%p165) target = $region20
      $region19: #{mynet_forward.1} parent=11 // pred_region
        _
      $region20: #{mynet_forward.1} parent=11 // pred_fallthru
        _
      // Predicated region
      $region21: #{mynet_forward.1} parent=11 // pred_check
        %p168 = pneg %p100
      $region22: #{mynet_forward.1} parent=11 // pred_check_branch
        %170 = sbr.rel (%p168) target = $region24
      $region23: #{mynet_forward.1} parent=11 // pred_region
        _
      $region24: #{mynet_forward.1} parent=11 // pred_fallthru
        _
      // Predicated region
      $region25: #{mynet_forward.1} parent=11 // pred_check
        %p171 = pneg %p121
      $region26: #{mynet_forward.1} parent=11 // pred_check_branch
        %173 = sbr.rel (%p171) target = $region28
      $region27: #{mynet_forward.1} parent=11 // pred_region
        _
      $region28: #{mynet_forward.1} parent=11 // pred_fallthru
        _
    $region12: #{mynet_forward.1} parent=5 // pred_fallthru
      _
    %p174 = scmp.lt.s32.totalorder %s11, 2
    // Predicated region
    $region29: #{mynet_forward.1} parent=5 // pred_check
      %p175 = pneg %p174
    $region30: #{mynet_forward.1} parent=5 // pred_check_branch
      %177 = sbr.rel (%p175) target = $region32
    $region31: #{mynet_forward.1} parent=5 // pred_region
      // Predicated region
      $region33: #{mynet_forward.1} parent=31 // pred_check
        %p178 = pneg %p31
      $region34: #{mynet_forward.1} parent=31 // pred_check_branch
        %180 = sbr.rel (%p178) target = $region36
      $region35: #{mynet_forward.1} parent=31 // pred_region
        %p181 = scmp.lt.s32.totalorder %s11, 1
        %s182 = scalar_select %p181, %s11, 1
        %s183 = smul.addr %s182, 25
        %s184 = smul.addr %s183, 8
        %s185 = scalar_lea.vmem %s0, %s184
      $region36: #{mynet_forward.1} parent=31 // pred_fallthru
        _
    $region32: #{mynet_forward.1} parent=5 // pred_fallthru
      _
    %p186 = scmp.le.s32.totalorder 1, %s11
    %p187 = scmp.lt.s32.totalorder %s11, 3
    %p188 = pnand %p186, %p187
    %p189 = pneg %p188
    // Predicated region
    $region37: #{mynet_forward.1} parent=5 // pred_check
      _
    $region38: #{mynet_forward.1} parent=5 // pred_check_branch
      %191 = sbr.rel (%p188) target = $region40
    $region39: #{mynet_forward.1} parent=5 // pred_region
      %s192 = ssub.s32 %s11, 1
      %p193 = scmp.lt.s32.totalorder %s16, 1
      %s194 = scalar_select %p193, %s16, 1
      %s195 = smul.addr %s194, 25
      %s196 = smul.addr %s195, 8
      %s197 = scalar_lea.vmem %s0, %s196
      %p198 = pneg %p37
      %p199 = pneg %p34
      %p200 = pneg %p58
      %p201 = pneg %p55
      %p202 = pneg %p79
      %p203 = pneg %p76
      %p204 = pneg %p100
      %p205 = pneg %p97
      %p206 = pneg %p121
      %p207 = pneg %p118
      %p208 = pneg %p147
      %p209 = pneg %p144
      %p210 = scmp.lt.s32.totalorder %s16, 1
      %s211 = scalar_select %p210, %s16, 1
      %s212 = smul.addr %s211, 25
      %s213 = smul.addr %s212, 8
      %s214 = scalar_lea.vmem %s5, %s213
      %p215 = scmp.lt.s32.totalorder %s16, 1
      %s216 = scalar_select %p215, %s16, 1
      %s217 = smul.addr %s216, 25
      %s218 = smul.addr %s217, 8
      %s219 = scalar_lea.vmem %s0, %s218
      %p220 = scmp.lt.s32.totalorder %s16, 1
      %s221 = scalar_select %p220, %s16, 1
      %s222 = smul.addr %s221, 25
      %s223 = smul.addr %s222, 8
      %s224 = scalar_lea.vmem %s5, %s223
      %p225 = scmp.eq.s32.totalorder %s16, 0
      // Predicated region
      $region41: #{mynet_forward.1} parent=39 // pred_check
        %p226 = pneg %p225
      $region42: #{mynet_forward.1} parent=39 // pred_check_branch
        %228 = sbr.rel (%p226) target = $region44
      $region43: #{mynet_forward.1} parent=39 // pred_region
        %vm229 = vcmask 523264
        %230 = vst.msk [vmem:[#allocation2 + $0xc8] sm:$0xff] %vm229, 0.0
        %231 = vst.msk [vmem:[#allocation2 + $0xd0] sm:$0xff] %vm229, 0.0
        %232 = vst.msk [vmem:[#allocation2 + $0xd8] sm:$0xff] %vm229, 0.0
        %233 = vst.msk [vmem:[#allocation2 + $0xe0] sm:$0xff] %vm229, 0.0
      $region44: #{mynet_forward.1} parent=39 // pred_fallthru
        _
      %v234 = vld [vmem:[%s219] sm:$0xff]
      %v235 = vld [vmem:[%s219 + $0x8] sm:$0xff]
      %v236 = vld [vmem:[%s219 + $0x10] sm:$0xff]
      %v237 = vld [vmem:[%s219 + $0x18] sm:$0xff]
      %v238 = vld [vmem:[%s219 + $0x20] sm:$0xff]
      %v239 = vld [vmem:[%s219 + $0x28] sm:$0xff]
      %v240 = vld [vmem:[%s219 + $0x30] sm:$0xff]
      %v241 = vld [vmem:[%s219 + $0x38] sm:$0xff]
      %v242 = vld [vmem:[%s219 + $0x40] sm:$0xff]
      %v243 = vld [vmem:[%s219 + $0x48] sm:$0xff]
      %v244 = vld [vmem:[%s219 + $0x50] sm:$0xff]
      %v245 = vld [vmem:[%s219 + $0x58] sm:$0xff]
      %v246 = vld [vmem:[%s219 + $0x60] sm:$0xff]
      %v247 = vld [vmem:[%s219 + $0x68] sm:$0xff]
      %v248 = vld [vmem:[%s219 + $0x70] sm:$0xff]
      %v249 = vld [vmem:[%s219 + $0x78] sm:$0xff]
      %v250 = vld [vmem:[%s219 + $0x80] sm:$0xff]
      %v251 = vld [vmem:[%s219 + $0x88] sm:$0xff]
      %v252 = vld [vmem:[%s219 + $0x90] sm:$0xff]
      %v253 = vld [vmem:[%s219 + $0x98] sm:$0xff]
      %v254 = vld [vmem:[%s219 + $0xa0] sm:$0xff]
      %v255 = vld [vmem:[%s219 + $0xa8] sm:$0xff]
      %v256 = vld [vmem:[%s219 + $0xb0] sm:$0xff]
      %v257 = vld [vmem:[%s219 + $0xb8] sm:$0xff]
      %v258 = vld [vmem:[%s219 + $0xc0] sm:$0xff]
      %v259 = vld [vmem:[%s1] sm:$0xff]
      %v260 = vld [vmem:[%s1 + $0x8] sm:$0xff]
      %v261 = vld [vmem:[%s1 + $0x10] sm:$0xff]
      %v262 = vld [vmem:[%s1 + $0x18] sm:$0xff]
      %v263 = vld [vmem:[%s2] sm:$0x1]
      %v265 = vperm.slane %v263, 0
      %vm267 = vcmask 261120
      %v269 = vsel %vm267, %v234, 0
      %v272 = vsel %vm267, %v235, 0
      %v275 = vsel %vm267, %v236, 0
      %v278 = vsel %vm267, %v237, 0
      %v281 = vsel %vm267, %v238, 0
      %v284 = vsel %vm267, %v239, 0
      %v287 = vsel %vm267, %v240, 0
      %v290 = vsel %vm267, %v241, 0
      %v293 = vsel %vm267, %v242, 0
      %v296 = vsel %vm267, %v243, 0
      %v299 = vsel %vm267, %v244, 0
      %v302 = vsel %vm267, %v245, 0
      %v305 = vsel %vm267, %v246, 0
      %v308 = vsel %vm267, %v247, 0
      %v311 = vsel %vm267, %v248, 0
      %v314 = vsel %vm267, %v249, 0
      %v317 = vsel %vm267, %v250, 0
      %v320 = vsel %vm267, %v251, 0
      %v323 = vsel %vm267, %v252, 0
      %v326 = vsel %vm267, %v253, 0
      %v329 = vsel %vm267, %v254, 0
      %v332 = vsel %vm267, %v255, 0
      %v335 = vsel %vm267, %v256, 0
      %v338 = vsel %vm267, %v257, 0
      %v341 = vsel %vm267, %v258, 0
      %343 = vmatpush.msra.mxu0 0.0
      %344 = vmatpush.msra.mxu0 0.0
      %345 = vmatpush.msra.mxu0 0.0
      %346 = vmatpush.msra.mxu0 0.0
      %347 = vmatpush.msra.mxu0 0.0
      %348 = vmatpush.msra.mxu0 0.0
      %349 = vmatpush.msra.mxu0 0.0
      %350 = vmatpush.msra.mxu0 0.0
      %351 = vmatpush.msra.mxu0 0.0
      %352 = vmatpush.msra.mxu0 0.0
      %353 = vmatpush.msra.mxu0 0.0
      %354 = vmatpush.msra.mxu0 0.0
      %355 = vmatpush.msra.mxu0 %v262
      %356 = vmatpush.msra.mxu0 %v261
      %357 = vmatpush.msra.mxu0 %v260
      %358 = vmatpush.msra.mxu0 %v259
      %359 = vmatmul.f32.gmra.mxu0 %v269
      %v360 = vpop.f32.mrf.mxu0
      %v361 = vadd.f32 %v265, %v360
      %362 = vmatmul.f32.gmra.mxu0 %v272
      %v363 = vpop.f32.mrf.mxu0
      %v364 = vadd.f32 %v265, %v363
      %365 = vmatmul.f32.gmra.mxu0 %v275
      %v366 = vpop.f32.mrf.mxu0
      %v367 = vadd.f32 %v265, %v366
      %368 = vmatmul.f32.gmra.mxu0 %v278
      %v369 = vpop.f32.mrf.mxu0
      %v370 = vadd.f32 %v265, %v369
      %371 = vmatmul.f32.gmra.mxu0 %v281
      %v372 = vpop.f32.mrf.mxu0
      %v373 = vadd.f32 %v265, %v372
      %374 = vmatmul.f32.gmra.mxu0 %v284
      %v375 = vpop.f32.mrf.mxu0
      %v376 = vadd.f32 %v265, %v375
      %377 = vmatmul.f32.gmra.mxu0 %v287
      %v378 = vpop.f32.mrf.mxu0
      %v379 = vadd.f32 %v265, %v378
      %380 = vmatmul.f32.gmra.mxu0 %v290
      %v381 = vpop.f32.mrf.mxu0
      %v382 = vadd.f32 %v265, %v381
      %383 = vmatmul.f32.gmra.mxu0 %v293
      %v384 = vpop.f32.mrf.mxu0
      %v385 = vadd.f32 %v265, %v384
      %386 = vmatmul.f32.gmra.mxu0 %v296
      %v387 = vpop.f32.mrf.mxu0
      %v388 = vadd.f32 %v265, %v387
      %389 = vmatmul.f32.gmra.mxu0 %v299
      %v390 = vpop.f32.mrf.mxu0
      %v391 = vadd.f32 %v265, %v390
      %392 = vmatmul.f32.gmra.mxu0 %v302
      %v393 = vpop.f32.mrf.mxu0
      %v394 = vadd.f32 %v265, %v393
      %395 = vmatmul.f32.gmra.mxu0 %v305
      %v396 = vpop.f32.mrf.mxu0
      %v397 = vadd.f32 %v265, %v396
      %398 = vmatmul.f32.gmra.mxu0 %v308
      %v399 = vpop.f32.mrf.mxu0
      %v400 = vadd.f32 %v265, %v399
      %401 = vmatmul.f32.gmra.mxu0 %v311
      %v402 = vpop.f32.mrf.mxu0
      %v403 = vadd.f32 %v265, %v402
      %404 = vmatmul.f32.gmra.mxu0 %v314
      %v405 = vpop.f32.mrf.mxu0
      %v406 = vadd.f32 %v265, %v405
      %407 = vmatmul.f32.gmra.mxu0 %v317
      %v408 = vpop.f32.mrf.mxu0
      %v409 = vadd.f32 %v265, %v408
      %410 = vmatmul.f32.gmra.mxu0 %v320
      %v411 = vpop.f32.mrf.mxu0
      %v412 = vadd.f32 %v265, %v411
      %413 = vmatmul.f32.gmra.mxu0 %v323
      %v414 = vpop.f32.mrf.mxu0
      %v415 = vadd.f32 %v265, %v414
      %416 = vmatmul.f32.gmra.mxu0 %v326
      %v417 = vpop.f32.mrf.mxu0
      %v418 = vadd.f32 %v265, %v417
      %419 = vmatmul.f32.gmra.mxu0 %v329
      %v420 = vpop.f32.mrf.mxu0
      %v421 = vadd.f32 %v265, %v420
      %422 = vmatmul.f32.gmra.mxu0 %v332
      %v423 = vpop.f32.mrf.mxu0
      %v424 = vadd.f32 %v265, %v423
      %425 = vmatmul.f32.gmra.mxu0 %v335
      %v426 = vpop.f32.mrf.mxu0
      %v427 = vadd.f32 %v265, %v426
      %428 = vmatmul.f32.gmra.mxu0 %v338
      %v429 = vpop.f32.mrf.mxu0
      %v430 = vadd.f32 %v265, %v429
      %431 = vmatmul.f32.gmra.mxu0 %v341
      %v432 = vpop.f32.mrf.mxu0
      %v433 = vadd.f32 %v265, %v432
      %434 = vdwg.mxu0
      %vm435 = vcmask 523264
      %436 = vst.msk [vmem:[#allocation2] sm:$0xff] %vm435, %v361
      %437 = vst.msk [vmem:[#allocation2 + $0x8] sm:$0xff] %vm435, %v364
      %438 = vst.msk [vmem:[#allocation2 + $0x10] sm:$0xff] %vm435, %v367
      %439 = vst.msk [vmem:[#allocation2 + $0x18] sm:$0xff] %vm435, %v370
      %440 = vst.msk [vmem:[#allocation2 + $0x20] sm:$0xff] %vm435, %v373
      %441 = vst.msk [vmem:[#allocation2 + $0x28] sm:$0xff] %vm435, %v376
      %442 = vst.msk [vmem:[#allocation2 + $0x30] sm:$0xff] %vm435, %v379
      %443 = vst.msk [vmem:[#allocation2 + $0x38] sm:$0xff] %vm435, %v382
      %444 = vst.msk [vmem:[#allocation2 + $0x40] sm:$0xff] %vm435, %v385
      %445 = vst.msk [vmem:[#allocation2 + $0x48] sm:$0xff] %vm435, %v388
      %446 = vst.msk [vmem:[#allocation2 + $0x50] sm:$0xff] %vm435, %v391
      %447 = vst.msk [vmem:[#allocation2 + $0x58] sm:$0xff] %vm435, %v394
      %448 = vst.msk [vmem:[#allocation2 + $0x60] sm:$0xff] %vm435, %v397
      %449 = vst.msk [vmem:[#allocation2 + $0x68] sm:$0xff] %vm435, %v400
      %450 = vst.msk [vmem:[#allocation2 + $0x70] sm:$0xff] %vm435, %v403
      %451 = vst.msk [vmem:[#allocation2 + $0x78] sm:$0xff] %vm435, %v406
      %452 = vst.msk [vmem:[#allocation2 + $0x80] sm:$0xff] %vm435, %v409
      %453 = vst.msk [vmem:[#allocation2 + $0x88] sm:$0xff] %vm435, %v412
      %454 = vst.msk [vmem:[#allocation2 + $0x90] sm:$0xff] %vm435, %v415
      %455 = vst.msk [vmem:[#allocation2 + $0x98] sm:$0xff] %vm435, %v418
      %456 = vst.msk [vmem:[#allocation2 + $0xa0] sm:$0xff] %vm435, %v421
      %457 = vst.msk [vmem:[#allocation2 + $0xa8] sm:$0xff] %vm435, %v424
      %458 = vst.msk [vmem:[#allocation2 + $0xb0] sm:$0xff] %vm435, %v427
      %459 = vst.msk [vmem:[#allocation2 + $0xb8] sm:$0xff] %vm435, %v430
      %460 = vst.msk [vmem:[#allocation2 + $0xc0] sm:$0xff] %vm435, %v433
      %v461 = vld [vmem:[#allocation2] sm:$0xff]
      %v462 = vld [vmem:[#allocation2 + $0x8] sm:$0xff]
      %v463 = vld [vmem:[#allocation2 + $0x10] sm:$0xff]
      %v464 = vld [vmem:[#allocation2 + $0x18] sm:$0xff]
      %v465 = vld [vmem:[#allocation2 + $0x20] sm:$0xff]
      %v466 = vld [vmem:[#allocation2 + $0x28] sm:$0xff]
      %v467 = vld [vmem:[#allocation2 + $0x30] sm:$0xff]
      %v468 = vld [vmem:[#allocation2 + $0x38] sm:$0xff]
      %v469 = vld [vmem:[#allocation2 + $0x40] sm:$0xff]
      %v470 = vld [vmem:[#allocation2 + $0x48] sm:$0xff]
      %v471 = vld [vmem:[#allocation2 + $0x50] sm:$0xff]
      %v472 = vld [vmem:[#allocation2 + $0x58] sm:$0xff]
      %v473 = vld [vmem:[#allocation2 + $0x60] sm:$0xff]
      %v474 = vld [vmem:[#allocation2 + $0x68] sm:$0xff]
      %v475 = vld [vmem:[#allocation2 + $0x70] sm:$0xff]
      %v476 = vld [vmem:[#allocation2 + $0x78] sm:$0xff]
      %v477 = vld [vmem:[#allocation2 + $0x80] sm:$0xff]
      %v478 = vld [vmem:[#allocation2 + $0x88] sm:$0xff]
      %v479 = vld [vmem:[#allocation2 + $0x90] sm:$0xff]
      %v480 = vld [vmem:[#allocation2 + $0x98] sm:$0xff]
      %v481 = vld [vmem:[#allocation2 + $0xa0] sm:$0xff]
      %v482 = vld [vmem:[#allocation2 + $0xa8] sm:$0xff]
      %v483 = vld [vmem:[#allocation2 + $0xb0] sm:$0xff]
      %v484 = vld [vmem:[#allocation2 + $0xb8] sm:$0xff]
      %v485 = vld [vmem:[#allocation2 + $0xc0] sm:$0xff]
      %486 = vst.msk [vmem:[#allocation3] sm:$0xff] %vm435, %v461
      %487 = vst.msk [vmem:[#allocation3 + $0x28] sm:$0xff] %vm435, %v462
      %488 = vst.msk [vmem:[#allocation3 + $0x50] sm:$0xff] %vm435, %v463
      %489 = vst.msk [vmem:[#allocation3 + $0x78] sm:$0xff] %vm435, %v464
      %490 = vst.msk [vmem:[#allocation3 + $0xa0] sm:$0xff] %vm435, %v465
      %491 = vst.msk [vmem:[#allocation3 + $0xc8] sm:$0xff] %vm435, %v466
      %492 = vst.msk [vmem:[#allocation3 + $0xf0] sm:$0xff] %vm435, %v467
      %493 = vst.msk [vmem:[#allocation3 + $0x118] sm:$0xff] %vm435, %v468
      %494 = vst.msk [vmem:[#allocation3 + $0x140] sm:$0xff] %vm435, %v469
      %495 = vst.msk [vmem:[#allocation3 + $0x168] sm:$0xff] %vm435, %v470
      %496 = vst.msk [vmem:[#allocation3 + $0x190] sm:$0xff] %vm435, %v471
      %497 = vst.msk [vmem:[#allocation3 + $0x1b8] sm:$0xff] %vm435, %v472
      %498 = vst.msk [vmem:[#allocation3 + $0x1e0] sm:$0xff] %vm435, %v473
      %499 = vst.msk [vmem:[#allocation3 + $0x208] sm:$0xff] %vm435, %v474
      %500 = vst.msk [vmem:[#allocation3 + $0x230] sm:$0xff] %vm435, %v475
      %501 = vst.msk [vmem:[#allocation3 + $0x258] sm:$0xff] %vm435, %v476
      %502 = vst.msk [vmem:[#allocation3 + $0x280] sm:$0xff] %vm435, %v477
      %503 = vst.msk [vmem:[#allocation3 + $0x2a8] sm:$0xff] %vm435, %v478
      %504 = vst.msk [vmem:[#allocation3 + $0x2d0] sm:$0xff] %vm435, %v479
      %505 = vst.msk [vmem:[#allocation3 + $0x2f8] sm:$0xff] %vm435, %v480
      %506 = vst.msk [vmem:[#allocation3 + $0x320] sm:$0xff] %vm435, %v481
      %507 = vst.msk [vmem:[#allocation3 + $0x348] sm:$0xff] %vm435, %v482
      %508 = vst.msk [vmem:[#allocation3 + $0x370] sm:$0xff] %vm435, %v483
      %509 = vst.msk [vmem:[#allocation3 + $0x398] sm:$0xff] %vm435, %v484
      %510 = vst.msk [vmem:[#allocation3 + $0x3c0] sm:$0xff] %vm435, %v485
      %v511 = vld [vmem:[#allocation2 + $0x1] sm:$0xff]
      %v512 = vld [vmem:[#allocation2 + $0x9] sm:$0xff]
      %v513 = vld [vmem:[#allocation2 + $0x11] sm:$0xff]
      %v514 = vld [vmem:[#allocation2 + $0x19] sm:$0xff]
      %v515 = vld [vmem:[#allocation2 + $0x21] sm:$0xff]
      %v516 = vld [vmem:[#allocation2 + $0x29] sm:$0xff]
      %v517 = vld [vmem:[#allocation2 + $0x31] sm:$0xff]
      %v518 = vld [vmem:[#allocation2 + $0x39] sm:$0xff]
      %v519 = vld [vmem:[#allocation2 + $0x41] sm:$0xff]
      %v520 = vld [vmem:[#allocation2 + $0x49] sm:$0xff]
      %v521 = vld [vmem:[#allocation2 + $0x51] sm:$0xff]
      %v522 = vld [vmem:[#allocation2 + $0x59] sm:$0xff]
      %v523 = vld [vmem:[#allocation2 + $0x61] sm:$0xff]
      %v524 = vld [vmem:[#allocation2 + $0x69] sm:$0xff]
      %v525 = vld [vmem:[#allocation2 + $0x71] sm:$0xff]
      %v526 = vld [vmem:[#allocation2 + $0x79] sm:$0xff]
      %v527 = vld [vmem:[#allocation2 + $0x81] sm:$0xff]
      %v528 = vld [vmem:[#allocation2 + $0x89] sm:$0xff]
      %v529 = vld [vmem:[#allocation2 + $0x91] sm:$0xff]
      %v530 = vld [vmem:[#allocation2 + $0x99] sm:$0xff]
      %v531 = vld [vmem:[#allocation2 + $0xa1] sm:$0xff]
      %v532 = vld [vmem:[#allocation2 + $0xa9] sm:$0xff]
      %v533 = vld [vmem:[#allocation2 + $0xb1] sm:$0xff]
      %v534 = vld [vmem:[#allocation2 + $0xb9] sm:$0xff]
      %v535 = vld [vmem:[#allocation2 + $0xc1] sm:$0xff]
      %561 = vrot.lane.b32.xlu0 %v511, 64
      %v562 = vpop.permute.xlu0 %561
      %563 = vrot.lane.b32.xlu0 %v512, 64
      %v564 = vpop.permute.xlu0 %563
      %565 = vrot.lane.b32.xlu0 %v513, 64
      %v566 = vpop.permute.xlu0 %565
      %567 = vrot.lane.b32.xlu0 %v514, 64
      %v568 = vpop.permute.xlu0 %567
      %569 = vrot.lane.b32.xlu0 %v515, 64
      %v570 = vpop.permute.xlu0 %569
      %571 = vrot.lane.b32.xlu0 %v516, 64
      %v572 = vpop.permute.xlu0 %571
      %573 = vrot.lane.b32.xlu0 %v517, 64
      %v574 = vpop.permute.xlu0 %573
      %575 = vrot.lane.b32.xlu0 %v518, 64
      %v576 = vpop.permute.xlu0 %575
      %577 = vrot.lane.b32.xlu0 %v519, 64
      %v578 = vpop.permute.xlu0 %577
      %579 = vrot.lane.b32.xlu0 %v520, 64
      %v580 = vpop.permute.xlu0 %579
      %581 = vrot.lane.b32.xlu0 %v521, 64
      %v582 = vpop.permute.xlu0 %581
      %583 = vrot.lane.b32.xlu0 %v522, 64
      %v584 = vpop.permute.xlu0 %583
      %585 = vrot.lane.b32.xlu0 %v523, 64
      %v586 = vpop.permute.xlu0 %585
      %587 = vrot.lane.b32.xlu0 %v524, 64
      %v588 = vpop.permute.xlu0 %587
      %589 = vrot.lane.b32.xlu0 %v525, 64
      %v590 = vpop.permute.xlu0 %589
      %591 = vrot.lane.b32.xlu0 %v526, 64
      %v592 = vpop.permute.xlu0 %591
      %593 = vrot.lane.b32.xlu0 %v527, 64
      %v594 = vpop.permute.xlu0 %593
      %595 = vrot.lane.b32.xlu0 %v528, 64
      %v596 = vpop.permute.xlu0 %595
      %597 = vrot.lane.b32.xlu0 %v529, 64
      %v598 = vpop.permute.xlu0 %597
      %599 = vrot.lane.b32.xlu0 %v530, 64
      %v600 = vpop.permute.xlu0 %599
      %601 = vrot.lane.b32.xlu0 %v531, 64
      %v602 = vpop.permute.xlu0 %601
      %603 = vrot.lane.b32.xlu0 %v532, 64
      %v604 = vpop.permute.xlu0 %603
      %605 = vrot.lane.b32.xlu0 %v533, 64
      %v606 = vpop.permute.xlu0 %605
      %607 = vrot.lane.b32.xlu0 %v534, 64
      %v608 = vpop.permute.xlu0 %607
      %609 = vrot.lane.b32.xlu0 %v535, 64
      %v610 = vpop.permute.xlu0 %609
      %vm636 = vcmask 1048064
      %637 = vst.msk [vmem:[#allocation3] sm:$0xff] %vm636, %v562
      %638 = vst.msk [vmem:[#allocation3 + $0x28] sm:$0xff] %vm636, %v564
      %639 = vst.msk [vmem:[#allocation3 + $0x50] sm:$0xff] %vm636, %v566
      %640 = vst.msk [vmem:[#allocation3 + $0x78] sm:$0xff] %vm636, %v568
      %641 = vst.msk [vmem:[#allocation3 + $0xa0] sm:$0xff] %vm636, %v570
      %642 = vst.msk [vmem:[#allocation3 + $0xc8] sm:$0xff] %vm636, %v572
      %643 = vst.msk [vmem:[#allocation3 + $0xf0] sm:$0xff] %vm636, %v574
      %644 = vst.msk [vmem:[#allocation3 + $0x118] sm:$0xff] %vm636, %v576
      %645 = vst.msk [vmem:[#allocation3 + $0x140] sm:$0xff] %vm636, %v578
      %646 = vst.msk [vmem:[#allocation3 + $0x168] sm:$0xff] %vm636, %v580
      %647 = vst.msk [vmem:[#allocation3 + $0x190] sm:$0xff] %vm636, %v582
      %648 = vst.msk [vmem:[#allocation3 + $0x1b8] sm:$0xff] %vm636, %v584
      %649 = vst.msk [vmem:[#allocation3 + $0x1e0] sm:$0xff] %vm636, %v586
      %650 = vst.msk [vmem:[#allocation3 + $0x208] sm:$0xff] %vm636, %v588
      %651 = vst.msk [vmem:[#allocation3 + $0x230] sm:$0xff] %vm636, %v590
      %652 = vst.msk [vmem:[#allocation3 + $0x258] sm:$0xff] %vm636, %v592
      %653 = vst.msk [vmem:[#allocation3 + $0x280] sm:$0xff] %vm636, %v594
      %654 = vst.msk [vmem:[#allocation3 + $0x2a8] sm:$0xff] %vm636, %v596
      %655 = vst.msk [vmem:[#allocation3 + $0x2d0] sm:$0xff] %vm636, %v598
      %656 = vst.msk [vmem:[#allocation3 + $0x2f8] sm:$0xff] %vm636, %v600
      %657 = vst.msk [vmem:[#allocation3 + $0x320] sm:$0xff] %vm636, %v602
      %658 = vst.msk [vmem:[#allocation3 + $0x348] sm:$0xff] %vm636, %v604
      %659 = vst.msk [vmem:[#allocation3 + $0x370] sm:$0xff] %vm636, %v606
      %660 = vst.msk [vmem:[#allocation3 + $0x398] sm:$0xff] %vm636, %v608
      %661 = vst.msk [vmem:[#allocation3 + $0x3c0] sm:$0xff] %vm636, %v610
      %v662 = vld [vmem:[#allocation2 + $0x2] sm:$0xff]
      %v663 = vld [vmem:[#allocation2 + $0xa] sm:$0xff]
      %v664 = vld [vmem:[#allocation2 + $0x12] sm:$0xff]
      %v665 = vld [vmem:[#allocation2 + $0x1a] sm:$0xff]
      %v666 = vld [vmem:[#allocation2 + $0x22] sm:$0xff]
      %v667 = vld [vmem:[#allocation2 + $0x2a] sm:$0xff]
      %v668 = vld [vmem:[#allocation2 + $0x32] sm:$0xff]
      %v669 = vld [vmem:[#allocation2 + $0x3a] sm:$0xff]
      %v670 = vld [vmem:[#allocation2 + $0x42] sm:$0xff]
      %v671 = vld [vmem:[#allocation2 + $0x4a] sm:$0xff]
      %v672 = vld [vmem:[#allocation2 + $0x52] sm:$0xff]
      %v673 = vld [vmem:[#allocation2 + $0x5a] sm:$0xff]
      %v674 = vld [vmem:[#allocation2 + $0x62] sm:$0xff]
      %v675 = vld [vmem:[#allocation2 + $0x6a] sm:$0xff]
      %v676 = vld [vmem:[#allocation2 + $0x72] sm:$0xff]
      %v677 = vld [vmem:[#allocation2 + $0x7a] sm:$0xff]
      %v678 = vld [vmem:[#allocation2 + $0x82] sm:$0xff]
      %v679 = vld [vmem:[#allocation2 + $0x8a] sm:$0xff]
      %v680 = vld [vmem:[#allocation2 + $0x92] sm:$0xff]
      %v681 = vld [vmem:[#allocation2 + $0x9a] sm:$0xff]
      %v682 = vld [vmem:[#allocation2 + $0xa2] sm:$0xff]
      %v683 = vld [vmem:[#allocation2 + $0xaa] sm:$0xff]
      %v684 = vld [vmem:[#allocation2 + $0xb2] sm:$0xff]
      %v685 = vld [vmem:[#allocation2 + $0xba] sm:$0xff]
      %v686 = vld [vmem:[#allocation2 + $0xc2] sm:$0xff]
      %687 = vst.msk [vmem:[#allocation3 + $0x8] sm:$0xff] %vm435, %v662
      %688 = vst.msk [vmem:[#allocation3 + $0x30] sm:$0xff] %vm435, %v663
      %689 = vst.msk [vmem:[#allocation3 + $0x58] sm:$0xff] %vm435, %v664
      %690 = vst.msk [vmem:[#allocation3 + $0x80] sm:$0xff] %vm435, %v665
      %691 = vst.msk [vmem:[#allocation3 + $0xa8] sm:$0xff] %vm435, %v666
      %692 = vst.msk [vmem:[#allocation3 + $0xd0] sm:$0xff] %vm435, %v667
      %693 = vst.msk [vmem:[#allocation3 + $0xf8] sm:$0xff] %vm435, %v668
      %694 = vst.msk [vmem:[#allocation3 + $0x120] sm:$0xff] %vm435, %v669
      %695 = vst.msk [vmem:[#allocation3 + $0x148] sm:$0xff] %vm435, %v670
      %696 = vst.msk [vmem:[#allocation3 + $0x170] sm:$0xff] %vm435, %v671
      %697 = vst.msk [vmem:[#allocation3 + $0x198] sm:$0xff] %vm435, %v672
      %698 = vst.msk [vmem:[#allocation3 + $0x1c0] sm:$0xff] %vm435, %v673
      %699 = vst.msk [vmem:[#allocation3 + $0x1e8] sm:$0xff] %vm435, %v674
      %700 = vst.msk [vmem:[#allocation3 + $0x210] sm:$0xff] %vm435, %v675
      %701 = vst.msk [vmem:[#allocation3 + $0x238] sm:$0xff] %vm435, %v676
      %702 = vst.msk [vmem:[#allocation3 + $0x260] sm:$0xff] %vm435, %v677
      %703 = vst.msk [vmem:[#allocation3 + $0x288] sm:$0xff] %vm435, %v678
      %704 = vst.msk [vmem:[#allocation3 + $0x2b0] sm:$0xff] %vm435, %v679
      %705 = vst.msk [vmem:[#allocation3 + $0x2d8] sm:$0xff] %vm435, %v680
      %706 = vst.msk [vmem:[#allocation3 + $0x300] sm:$0xff] %vm435, %v681
      %707 = vst.msk [vmem:[#allocation3 + $0x328] sm:$0xff] %vm435, %v682
      %708 = vst.msk [vmem:[#allocation3 + $0x350] sm:$0xff] %vm435, %v683
      %709 = vst.msk [vmem:[#allocation3 + $0x378] sm:$0xff] %vm435, %v684
      %710 = vst.msk [vmem:[#allocation3 + $0x3a0] sm:$0xff] %vm435, %v685
      %711 = vst.msk [vmem:[#allocation3 + $0x3c8] sm:$0xff] %vm435, %v686
      %v712 = vld [vmem:[#allocation2 + $0xe] sm:$0xff]
      %v713 = vld [vmem:[#allocation2 + $0x16] sm:$0xff]
      %v714 = vld [vmem:[#allocation2 + $0x1e] sm:$0xff]
      %v715 = vld [vmem:[#allocation2 + $0x26] sm:$0xff]
      %v716 = vld [vmem:[#allocation2 + $0x2e] sm:$0xff]
      %v717 = vld [vmem:[#allocation2 + $0x36] sm:$0xff]
      %v718 = vld [vmem:[#allocation2 + $0x3e] sm:$0xff]
      %v719 = vld [vmem:[#allocation2 + $0x46] sm:$0xff]
      %v720 = vld [vmem:[#allocation2 + $0x4e] sm:$0xff]
      %v721 = vld [vmem:[#allocation2 + $0x56] sm:$0xff]
      %v722 = vld [vmem:[#allocation2 + $0x5e] sm:$0xff]
      %v723 = vld [vmem:[#allocation2 + $0x66] sm:$0xff]
      %v724 = vld [vmem:[#allocation2 + $0x6e] sm:$0xff]
      %v725 = vld [vmem:[#allocation2 + $0x76] sm:$0xff]
      %v726 = vld [vmem:[#allocation2 + $0x7e] sm:$0xff]
      %v727 = vld [vmem:[#allocation2 + $0x86] sm:$0xff]
      %v728 = vld [vmem:[#allocation2 + $0x8e] sm:$0xff]
      %v729 = vld [vmem:[#allocation2 + $0x96] sm:$0xff]
      %v730 = vld [vmem:[#allocation2 + $0x9e] sm:$0xff]
      %v731 = vld [vmem:[#allocation2 + $0xa6] sm:$0xff]
      %v732 = vld [vmem:[#allocation2 + $0xae] sm:$0xff]
      %v733 = vld [vmem:[#allocation2 + $0xb6] sm:$0xff]
      %v734 = vld [vmem:[#allocation2 + $0xbe] sm:$0xff]
      %v735 = vld [vmem:[#allocation2 + $0xc6] sm:$0xff]
      %v736 = vld [vmem:[#allocation2 + $0xce] sm:$0xff]
      %762 = vrot.lane.b32.xlu0 %v712, 64
      %v763 = vpop.permute.xlu0 %762
      %764 = vrot.lane.b32.xlu0 %v713, 64
      %v765 = vpop.permute.xlu0 %764
      %766 = vrot.lane.b32.xlu0 %v714, 64
      %v767 = vpop.permute.xlu0 %766
      %768 = vrot.lane.b32.xlu0 %v715, 64
      %v769 = vpop.permute.xlu0 %768
      %770 = vrot.lane.b32.xlu0 %v716, 64
      %v771 = vpop.permute.xlu0 %770
      %772 = vrot.lane.b32.xlu0 %v717, 64
      %v773 = vpop.permute.xlu0 %772
      %774 = vrot.lane.b32.xlu0 %v718, 64
      %v775 = vpop.permute.xlu0 %774
      %776 = vrot.lane.b32.xlu0 %v719, 64
      %v777 = vpop.permute.xlu0 %776
      %778 = vrot.lane.b32.xlu0 %v720, 64
      %v779 = vpop.permute.xlu0 %778
      %780 = vrot.lane.b32.xlu0 %v721, 64
      %v781 = vpop.permute.xlu0 %780
      %782 = vrot.lane.b32.xlu0 %v722, 64
      %v783 = vpop.permute.xlu0 %782
      %784 = vrot.lane.b32.xlu0 %v723, 64
      %v785 = vpop.permute.xlu0 %784
      %786 = vrot.lane.b32.xlu0 %v724, 64
      %v787 = vpop.permute.xlu0 %786
      %788 = vrot.lane.b32.xlu0 %v725, 64
      %v789 = vpop.permute.xlu0 %788
      %790 = vrot.lane.b32.xlu0 %v726, 64
      %v791 = vpop.permute.xlu0 %790
      %792 = vrot.lane.b32.xlu0 %v727, 64
      %v793 = vpop.permute.xlu0 %792
      %794 = vrot.lane.b32.xlu0 %v728, 64
      %v795 = vpop.permute.xlu0 %794
      %796 = vrot.lane.b32.xlu0 %v729, 64
      %v797 = vpop.permute.xlu0 %796
      %798 = vrot.lane.b32.xlu0 %v730, 64
      %v799 = vpop.permute.xlu0 %798
      %800 = vrot.lane.b32.xlu0 %v731, 64
      %v801 = vpop.permute.xlu0 %800
      %802 = vrot.lane.b32.xlu0 %v732, 64
      %v803 = vpop.permute.xlu0 %802
      %804 = vrot.lane.b32.xlu0 %v733, 64
      %v805 = vpop.permute.xlu0 %804
      %806 = vrot.lane.b32.xlu0 %v734, 64
      %v807 = vpop.permute.xlu0 %806
      %808 = vrot.lane.b32.xlu0 %v735, 64
      %v809 = vpop.permute.xlu0 %808
      %810 = vrot.lane.b32.xlu0 %v736, 64
      %v811 = vpop.permute.xlu0 %810
      %837 = vst.msk [vmem:[#allocation3 + $0x8] sm:$0xff] %vm636, %v763
      %838 = vst.msk [vmem:[#allocation3 + $0x30] sm:$0xff] %vm636, %v765
      %839 = vst.msk [vmem:[#allocation3 + $0x58] sm:$0xff] %vm636, %v767
      %840 = vst.msk [vmem:[#allocation3 + $0x80] sm:$0xff] %vm636, %v769
      %841 = vst.msk [vmem:[#allocation3 + $0xa8] sm:$0xff] %vm636, %v771
      %842 = vst.msk [vmem:[#allocation3 + $0xd0] sm:$0xff] %vm636, %v773
      %843 = vst.msk [vmem:[#allocation3 + $0xf8] sm:$0xff] %vm636, %v775
      %844 = vst.msk [vmem:[#allocation3 + $0x120] sm:$0xff] %vm636, %v777
      %845 = vst.msk [vmem:[#allocation3 + $0x148] sm:$0xff] %vm636, %v779
      %846 = vst.msk [vmem:[#allocation3 + $0x170] sm:$0xff] %vm636, %v781
      %847 = vst.msk [vmem:[#allocation3 + $0x198] sm:$0xff] %vm636, %v783
      %848 = vst.msk [vmem:[#allocation3 + $0x1c0] sm:$0xff] %vm636, %v785
      %849 = vst.msk [vmem:[#allocation3 + $0x1e8] sm:$0xff] %vm636, %v787
      %850 = vst.msk [vmem:[#allocation3 + $0x210] sm:$0xff] %vm636, %v789
      %851 = vst.msk [vmem:[#allocation3 + $0x238] sm:$0xff] %vm636, %v791
      %852 = vst.msk [vmem:[#allocation3 + $0x260] sm:$0xff] %vm636, %v793
      %853 = vst.msk [vmem:[#allocation3 + $0x288] sm:$0xff] %vm636, %v795
      %854 = vst.msk [vmem:[#allocation3 + $0x2b0] sm:$0xff] %vm636, %v797
      %855 = vst.msk [vmem:[#allocation3 + $0x2d8] sm:$0xff] %vm636, %v799
      %856 = vst.msk [vmem:[#allocation3 + $0x300] sm:$0xff] %vm636, %v801
      %857 = vst.msk [vmem:[#allocation3 + $0x328] sm:$0xff] %vm636, %v803
      %858 = vst.msk [vmem:[#allocation3 + $0x350] sm:$0xff] %vm636, %v805
      %859 = vst.msk [vmem:[#allocation3 + $0x378] sm:$0xff] %vm636, %v807
      %860 = vst.msk [vmem:[#allocation3 + $0x3a0] sm:$0xff] %vm636, %v809
      %861 = vst.msk [vmem:[#allocation3 + $0x3c8] sm:$0xff] %vm636, %v811
      %v862 = vld [vmem:[#allocation2 + $0xf] sm:$0xff]
      %v863 = vld [vmem:[#allocation2 + $0x17] sm:$0xff]
      %v864 = vld [vmem:[#allocation2 + $0x1f] sm:$0xff]
      %v865 = vld [vmem:[#allocation2 + $0x27] sm:$0xff]
      %v866 = vld [vmem:[#allocation2 + $0x2f] sm:$0xff]
      %v867 = vld [vmem:[#allocation2 + $0x37] sm:$0xff]
      %v868 = vld [vmem:[#allocation2 + $0x3f] sm:$0xff]
      %v869 = vld [vmem:[#allocation2 + $0x47] sm:$0xff]
      %v870 = vld [vmem:[#allocation2 + $0x4f] sm:$0xff]
      %v871 = vld [vmem:[#allocation2 + $0x57] sm:$0xff]
      %v872 = vld [vmem:[#allocation2 + $0x5f] sm:$0xff]
      %v873 = vld [vmem:[#allocation2 + $0x67] sm:$0xff]
      %v874 = vld [vmem:[#allocation2 + $0x6f] sm:$0xff]
      %v875 = vld [vmem:[#allocation2 + $0x77] sm:$0xff]
      %v876 = vld [vmem:[#allocation2 + $0x7f] sm:$0xff]
      %v877 = vld [vmem:[#allocation2 + $0x87] sm:$0xff]
      %v878 = vld [vmem:[#allocation2 + $0x8f] sm:$0xff]
      %v879 = vld [vmem:[#allocation2 + $0x97] sm:$0xff]
      %v880 = vld [vmem:[#allocation2 + $0x9f] sm:$0xff]
      %v881 = vld [vmem:[#allocation2 + $0xa7] sm:$0xff]
      %v882 = vld [vmem:[#allocation2 + $0xaf] sm:$0xff]
      %v883 = vld [vmem:[#allocation2 + $0xb7] sm:$0xff]
      %v884 = vld [vmem:[#allocation2 + $0xbf] sm:$0xff]
      %v885 = vld [vmem:[#allocation2 + $0xc7] sm:$0xff]
      %v886 = vld [vmem:[#allocation2 + $0xcf] sm:$0xff]
      %887 = vst.msk [vmem:[#allocation3 + $0x10] sm:$0xff] %vm435, %v862
      %888 = vst.msk [vmem:[#allocation3 + $0x38] sm:$0xff] %vm435, %v863
      %889 = vst.msk [vmem:[#allocation3 + $0x60] sm:$0xff] %vm435, %v864
      %890 = vst.msk [vmem:[#allocation3 + $0x88] sm:$0xff] %vm435, %v865
      %891 = vst.msk [vmem:[#allocation3 + $0xb0] sm:$0xff] %vm435, %v866
      %892 = vst.msk [vmem:[#allocation3 + $0xd8] sm:$0xff] %vm435, %v867
      %893 = vst.msk [vmem:[#allocation3 + $0x100] sm:$0xff] %vm435, %v868
      %894 = vst.msk [vmem:[#allocation3 + $0x128] sm:$0xff] %vm435, %v869
      %895 = vst.msk [vmem:[#allocation3 + $0x150] sm:$0xff] %vm435, %v870
      %896 = vst.msk [vmem:[#allocation3 + $0x178] sm:$0xff] %vm435, %v871
      %897 = vst.msk [vmem:[#allocation3 + $0x1a0] sm:$0xff] %vm435, %v872
      %898 = vst.msk [vmem:[#allocation3 + $0x1c8] sm:$0xff] %vm435, %v873
      %899 = vst.msk [vmem:[#allocation3 + $0x1f0] sm:$0xff] %vm435, %v874
      %900 = vst.msk [vmem:[#allocation3 + $0x218] sm:$0xff] %vm435, %v875
      %901 = vst.msk [vmem:[#allocation3 + $0x240] sm:$0xff] %vm435, %v876
      %902 = vst.msk [vmem:[#allocation3 + $0x268] sm:$0xff] %vm435, %v877
      %903 = vst.msk [vmem:[#allocation3 + $0x290] sm:$0xff] %vm435, %v878
      %904 = vst.msk [vmem:[#allocation3 + $0x2b8] sm:$0xff] %vm435, %v879
      %905 = vst.msk [vmem:[#allocation3 + $0x2e0] sm:$0xff] %vm435, %v880
      %906 = vst.msk [vmem:[#allocation3 + $0x308] sm:$0xff] %vm435, %v881
      %907 = vst.msk [vmem:[#allocation3 + $0x330] sm:$0xff] %vm435, %v882
      %908 = vst.msk [vmem:[#allocation3 + $0x358] sm:$0xff] %vm435, %v883
      %909 = vst.msk [vmem:[#allocation3 + $0x380] sm:$0xff] %vm435, %v884
      %910 = vst.msk [vmem:[#allocation3 + $0x3a8] sm:$0xff] %vm435, %v885
      %911 = vst.msk [vmem:[#allocation3 + $0x3d0] sm:$0xff] %vm435, %v886
      %v912 = vld [vmem:[#allocation2 + $0x10] sm:$0xff]
      %v913 = vld [vmem:[#allocation2 + $0x18] sm:$0xff]
      %v914 = vld [vmem:[#allocation2 + $0x20] sm:$0xff]
      %v915 = vld [vmem:[#allocation2 + $0x28] sm:$0xff]
      %v916 = vld [vmem:[#allocation2 + $0x30] sm:$0xff]
      %v917 = vld [vmem:[#allocation2 + $0x38] sm:$0xff]
      %v918 = vld [vmem:[#allocation2 + $0x40] sm:$0xff]
      %v919 = vld [vmem:[#allocation2 + $0x48] sm:$0xff]
      %v920 = vld [vmem:[#allocation2 + $0x50] sm:$0xff]
      %v921 = vld [vmem:[#allocation2 + $0x58] sm:$0xff]
      %v922 = vld [vmem:[#allocation2 + $0x60] sm:$0xff]
      %v923 = vld [vmem:[#allocation2 + $0x68] sm:$0xff]
      %v924 = vld [vmem:[#allocation2 + $0x70] sm:$0xff]
      %v925 = vld [vmem:[#allocation2 + $0x78] sm:$0xff]
      %v926 = vld [vmem:[#allocation2 + $0x80] sm:$0xff]
      %v927 = vld [vmem:[#allocation2 + $0x88] sm:$0xff]
      %v928 = vld [vmem:[#allocation2 + $0x90] sm:$0xff]
      %v929 = vld [vmem:[#allocation2 + $0x98] sm:$0xff]
      %v930 = vld [vmem:[#allocation2 + $0xa0] sm:$0xff]
      %v931 = vld [vmem:[#allocation2 + $0xa8] sm:$0xff]
      %v932 = vld [vmem:[#allocation2 + $0xb0] sm:$0xff]
      %v933 = vld [vmem:[#allocation2 + $0xb8] sm:$0xff]
      %v934 = vld [vmem:[#allocation2 + $0xc0] sm:$0xff]
      %v935 = vld [vmem:[#allocation2 + $0xc8] sm:$0xff]
      %v936 = vld [vmem:[#allocation2 + $0xd0] sm:$0xff]
      %962 = vrot.lane.b32.xlu0 %v912, 64
      %v963 = vpop.permute.xlu0 %962
      %964 = vrot.lane.b32.xlu0 %v913, 64
      %v965 = vpop.permute.xlu0 %964
      %966 = vrot.lane.b32.xlu0 %v914, 64
      %v967 = vpop.permute.xlu0 %966
      %968 = vrot.lane.b32.xlu0 %v915, 64
      %v969 = vpop.permute.xlu0 %968
      %970 = vrot.lane.b32.xlu0 %v916, 64
      %v971 = vpop.permute.xlu0 %970
      %972 = vrot.lane.b32.xlu0 %v917, 64
      %v973 = vpop.permute.xlu0 %972
      %974 = vrot.lane.b32.xlu0 %v918, 64
      %v975 = vpop.permute.xlu0 %974
      %976 = vrot.lane.b32.xlu0 %v919, 64
      %v977 = vpop.permute.xlu0 %976
      %978 = vrot.lane.b32.xlu0 %v920, 64
      %v979 = vpop.permute.xlu0 %978
      %980 = vrot.lane.b32.xlu0 %v921, 64
      %v981 = vpop.permute.xlu0 %980
      %982 = vrot.lane.b32.xlu0 %v922, 64
      %v983 = vpop.permute.xlu0 %982
      %984 = vrot.lane.b32.xlu0 %v923, 64
      %v985 = vpop.permute.xlu0 %984
      %986 = vrot.lane.b32.xlu0 %v924, 64
      %v987 = vpop.permute.xlu0 %986
      %988 = vrot.lane.b32.xlu0 %v925, 64
      %v989 = vpop.permute.xlu0 %988
      %990 = vrot.lane.b32.xlu0 %v926, 64
      %v991 = vpop.permute.xlu0 %990
      %992 = vrot.lane.b32.xlu0 %v927, 64
      %v993 = vpop.permute.xlu0 %992
      %994 = vrot.lane.b32.xlu0 %v928, 64
      %v995 = vpop.permute.xlu0 %994
      %996 = vrot.lane.b32.xlu0 %v929, 64
      %v997 = vpop.permute.xlu0 %996
      %998 = vrot.lane.b32.xlu0 %v930, 64
      %v999 = vpop.permute.xlu0 %998
      %1000 = vrot.lane.b32.xlu0 %v931, 64
      %v1001 = vpop.permute.xlu0 %1000
      %1002 = vrot.lane.b32.xlu0 %v932, 64
      %v1003 = vpop.permute.xlu0 %1002
      %1004 = vrot.lane.b32.xlu0 %v933, 64
      %v1005 = vpop.permute.xlu0 %1004
      %1006 = vrot.lane.b32.xlu0 %v934, 64
      %v1007 = vpop.permute.xlu0 %1006
      %1008 = vrot.lane.b32.xlu0 %v935, 64
      %v1009 = vpop.permute.xlu0 %1008
      %1010 = vrot.lane.b32.xlu0 %v936, 64
      %v1011 = vpop.permute.xlu0 %1010
      %1037 = vst.msk [vmem:[#allocation3 + $0x10] sm:$0xff] %vm636, %v963
      %1038 = vst.msk [vmem:[#allocation3 + $0x38] sm:$0xff] %vm636, %v965
      %1039 = vst.msk [vmem:[#allocation3 + $0x60] sm:$0xff] %vm636, %v967
      %1040 = vst.msk [vmem:[#allocation3 + $0x88] sm:$0xff] %vm636, %v969
      %1041 = vst.msk [vmem:[#allocation3 + $0xb0] sm:$0xff] %vm636, %v971
      %1042 = vst.msk [vmem:[#allocation3 + $0xd8] sm:$0xff] %vm636, %v973
      %1043 = vst.msk [vmem:[#allocation3 + $0x100] sm:$0xff] %vm636, %v975
      %1044 = vst.msk [vmem:[#allocation3 + $0x128] sm:$0xff] %vm636, %v977
      %1045 = vst.msk [vmem:[#allocation3 + $0x150] sm:$0xff] %vm636, %v979
      %1046 = vst.msk [vmem:[#allocation3 + $0x178] sm:$0xff] %vm636, %v981
      %1047 = vst.msk [vmem:[#allocation3 + $0x1a0] sm:$0xff] %vm636, %v983
      %1048 = vst.msk [vmem:[#allocation3 + $0x1c8] sm:$0xff] %vm636, %v985
      %1049 = vst.msk [vmem:[#allocation3 + $0x1f0] sm:$0xff] %vm636, %v987
      %1050 = vst.msk [vmem:[#allocation3 + $0x218] sm:$0xff] %vm636, %v989
      %1051 = vst.msk [vmem:[#allocation3 + $0x240] sm:$0xff] %vm636, %v991
      %1052 = vst.msk [vmem:[#allocation3 + $0x268] sm:$0xff] %vm636, %v993
      %1053 = vst.msk [vmem:[#allocation3 + $0x290] sm:$0xff] %vm636, %v995
      %1054 = vst.msk [vmem:[#allocation3 + $0x2b8] sm:$0xff] %vm636, %v997
      %1055 = vst.msk [vmem:[#allocation3 + $0x2e0] sm:$0xff] %vm636, %v999
      %1056 = vst.msk [vmem:[#allocation3 + $0x308] sm:$0xff] %vm636, %v1001
      %1057 = vst.msk [vmem:[#allocation3 + $0x330] sm:$0xff] %vm636, %v1003
      %1058 = vst.msk [vmem:[#allocation3 + $0x358] sm:$0xff] %vm636, %v1005
      %1059 = vst.msk [vmem:[#allocation3 + $0x380] sm:$0xff] %vm636, %v1007
      %1060 = vst.msk [vmem:[#allocation3 + $0x3a8] sm:$0xff] %vm636, %v1009
      %1061 = vst.msk [vmem:[#allocation3 + $0x3d0] sm:$0xff] %vm636, %v1011
      %v1062 = vld [vmem:[#allocation2 + $0x1c] sm:$0xff]
      %v1063 = vld [vmem:[#allocation2 + $0x24] sm:$0xff]
      %v1064 = vld [vmem:[#allocation2 + $0x2c] sm:$0xff]
      %v1065 = vld [vmem:[#allocation2 + $0x34] sm:$0xff]
      %v1066 = vld [vmem:[#allocation2 + $0x3c] sm:$0xff]
      %v1067 = vld [vmem:[#allocation2 + $0x44] sm:$0xff]
      %v1068 = vld [vmem:[#allocation2 + $0x4c] sm:$0xff]
      %v1069 = vld [vmem:[#allocation2 + $0x54] sm:$0xff]
      %v1070 = vld [vmem:[#allocation2 + $0x5c] sm:$0xff]
      %v1071 = vld [vmem:[#allocation2 + $0x64] sm:$0xff]
      %v1072 = vld [vmem:[#allocation2 + $0x6c] sm:$0xff]
      %v1073 = vld [vmem:[#allocation2 + $0x74] sm:$0xff]
      %v1074 = vld [vmem:[#allocation2 + $0x7c] sm:$0xff]
      %v1075 = vld [vmem:[#allocation2 + $0x84] sm:$0xff]
      %v1076 = vld [vmem:[#allocation2 + $0x8c] sm:$0xff]
      %v1077 = vld [vmem:[#allocation2 + $0x94] sm:$0xff]
      %v1078 = vld [vmem:[#allocation2 + $0x9c] sm:$0xff]
      %v1079 = vld [vmem:[#allocation2 + $0xa4] sm:$0xff]
      %v1080 = vld [vmem:[#allocation2 + $0xac] sm:$0xff]
      %v1081 = vld [vmem:[#allocation2 + $0xb4] sm:$0xff]
      %v1082 = vld [vmem:[#allocation2 + $0xbc] sm:$0xff]
      %v1083 = vld [vmem:[#allocation2 + $0xc4] sm:$0xff]
      %v1084 = vld [vmem:[#allocation2 + $0xcc] sm:$0xff]
      %v1085 = vld [vmem:[#allocation2 + $0xd4] sm:$0xff]
      %v1086 = vld [vmem:[#allocation2 + $0xdc] sm:$0xff]
      %1087 = vst.msk [vmem:[#allocation3 + $0x18] sm:$0xff] %vm435, %v1062
      %1088 = vst.msk [vmem:[#allocation3 + $0x40] sm:$0xff] %vm435, %v1063
      %1089 = vst.msk [vmem:[#allocation3 + $0x68] sm:$0xff] %vm435, %v1064
      %1090 = vst.msk [vmem:[#allocation3 + $0x90] sm:$0xff] %vm435, %v1065
      %1091 = vst.msk [vmem:[#allocation3 + $0xb8] sm:$0xff] %vm435, %v1066
      %1092 = vst.msk [vmem:[#allocation3 + $0xe0] sm:$0xff] %vm435, %v1067
      %1093 = vst.msk [vmem:[#allocation3 + $0x108] sm:$0xff] %vm435, %v1068
      %1094 = vst.msk [vmem:[#allocation3 + $0x130] sm:$0xff] %vm435, %v1069
      %1095 = vst.msk [vmem:[#allocation3 + $0x158] sm:$0xff] %vm435, %v1070
      %1096 = vst.msk [vmem:[#allocation3 + $0x180] sm:$0xff] %vm435, %v1071
      %1097 = vst.msk [vmem:[#allocation3 + $0x1a8] sm:$0xff] %vm435, %v1072
      %1098 = vst.msk [vmem:[#allocation3 + $0x1d0] sm:$0xff] %vm435, %v1073
      %1099 = vst.msk [vmem:[#allocation3 + $0x1f8] sm:$0xff] %vm435, %v1074
      %1100 = vst.msk [vmem:[#allocation3 + $0x220] sm:$0xff] %vm435, %v1075
      %1101 = vst.msk [vmem:[#allocation3 + $0x248] sm:$0xff] %vm435, %v1076
      %1102 = vst.msk [vmem:[#allocation3 + $0x270] sm:$0xff] %vm435, %v1077
      %1103 = vst.msk [vmem:[#allocation3 + $0x298] sm:$0xff] %vm435, %v1078
      %1104 = vst.msk [vmem:[#allocation3 + $0x2c0] sm:$0xff] %vm435, %v1079
      %1105 = vst.msk [vmem:[#allocation3 + $0x2e8] sm:$0xff] %vm435, %v1080
      %1106 = vst.msk [vmem:[#allocation3 + $0x310] sm:$0xff] %vm435, %v1081
      %1107 = vst.msk [vmem:[#allocation3 + $0x338] sm:$0xff] %vm435, %v1082
      %1108 = vst.msk [vmem:[#allocation3 + $0x360] sm:$0xff] %vm435, %v1083
      %1109 = vst.msk [vmem:[#allocation3 + $0x388] sm:$0xff] %vm435, %v1084
      %1110 = vst.msk [vmem:[#allocation3 + $0x3b0] sm:$0xff] %vm435, %v1085
      %1111 = vst.msk [vmem:[#allocation3 + $0x3d8] sm:$0xff] %vm435, %v1086
      %v1112 = vld [vmem:[#allocation2 + $0x1d] sm:$0xff]
      %v1113 = vld [vmem:[#allocation2 + $0x25] sm:$0xff]
      %v1114 = vld [vmem:[#allocation2 + $0x2d] sm:$0xff]
      %v1115 = vld [vmem:[#allocation2 + $0x35] sm:$0xff]
      %v1116 = vld [vmem:[#allocation2 + $0x3d] sm:$0xff]
      %v1117 = vld [vmem:[#allocation2 + $0x45] sm:$0xff]
      %v1118 = vld [vmem:[#allocation2 + $0x4d] sm:$0xff]
      %v1119 = vld [vmem:[#allocation2 + $0x55] sm:$0xff]
      %v1120 = vld [vmem:[#allocation2 + $0x5d] sm:$0xff]
      %v1121 = vld [vmem:[#allocation2 + $0x65] sm:$0xff]
      %v1122 = vld [vmem:[#allocation2 + $0x6d] sm:$0xff]
      %v1123 = vld [vmem:[#allocation2 + $0x75] sm:$0xff]
      %v1124 = vld [vmem:[#allocation2 + $0x7d] sm:$0xff]
      %v1125 = vld [vmem:[#allocation2 + $0x85] sm:$0xff]
      %v1126 = vld [vmem:[#allocation2 + $0x8d] sm:$0xff]
      %v1127 = vld [vmem:[#allocation2 + $0x95] sm:$0xff]
      %v1128 = vld [vmem:[#allocation2 + $0x9d] sm:$0xff]
      %v1129 = vld [vmem:[#allocation2 + $0xa5] sm:$0xff]
      %v1130 = vld [vmem:[#allocation2 + $0xad] sm:$0xff]
      %v1131 = vld [vmem:[#allocation2 + $0xb5] sm:$0xff]
      %v1132 = vld [vmem:[#allocation2 + $0xbd] sm:$0xff]
      %v1133 = vld [vmem:[#allocation2 + $0xc5] sm:$0xff]
      %v1134 = vld [vmem:[#allocation2 + $0xcd] sm:$0xff]
      %v1135 = vld [vmem:[#allocation2 + $0xd5] sm:$0xff]
      %v1136 = vld [vmem:[#allocation2 + $0xdd] sm:$0xff]
      %1162 = vrot.lane.b32.xlu0 %v1112, 64
      %v1163 = vpop.permute.xlu0 %1162
      %1164 = vrot.lane.b32.xlu0 %v1113, 64
      %v1165 = vpop.permute.xlu0 %1164
      %1166 = vrot.lane.b32.xlu0 %v1114, 64
      %v1167 = vpop.permute.xlu0 %1166
      %1168 = vrot.lane.b32.xlu0 %v1115, 64
      %v1169 = vpop.permute.xlu0 %1168
      %1170 = vrot.lane.b32.xlu0 %v1116, 64
      %v1171 = vpop.permute.xlu0 %1170
      %1172 = vrot.lane.b32.xlu0 %v1117, 64
      %v1173 = vpop.permute.xlu0 %1172
      %1174 = vrot.lane.b32.xlu0 %v1118, 64
      %v1175 = vpop.permute.xlu0 %1174
      %1176 = vrot.lane.b32.xlu0 %v1119, 64
      %v1177 = vpop.permute.xlu0 %1176
      %1178 = vrot.lane.b32.xlu0 %v1120, 64
      %v1179 = vpop.permute.xlu0 %1178
      %1180 = vrot.lane.b32.xlu0 %v1121, 64
      %v1181 = vpop.permute.xlu0 %1180
      %1182 = vrot.lane.b32.xlu0 %v1122, 64
      %v1183 = vpop.permute.xlu0 %1182
      %1184 = vrot.lane.b32.xlu0 %v1123, 64
      %v1185 = vpop.permute.xlu0 %1184
      %1186 = vrot.lane.b32.xlu0 %v1124, 64
      %v1187 = vpop.permute.xlu0 %1186
      %1188 = vrot.lane.b32.xlu0 %v1125, 64
      %v1189 = vpop.permute.xlu0 %1188
      %1190 = vrot.lane.b32.xlu0 %v1126, 64
      %v1191 = vpop.permute.xlu0 %1190
      %1192 = vrot.lane.b32.xlu0 %v1127, 64
      %v1193 = vpop.permute.xlu0 %1192
      %1194 = vrot.lane.b32.xlu0 %v1128, 64
      %v1195 = vpop.permute.xlu0 %1194
      %1196 = vrot.lane.b32.xlu0 %v1129, 64
      %v1197 = vpop.permute.xlu0 %1196
      %1198 = vrot.lane.b32.xlu0 %v1130, 64
      %v1199 = vpop.permute.xlu0 %1198
      %1200 = vrot.lane.b32.xlu0 %v1131, 64
      %v1201 = vpop.permute.xlu0 %1200
      %1202 = vrot.lane.b32.xlu0 %v1132, 64
      %v1203 = vpop.permute.xlu0 %1202
      %1204 = vrot.lane.b32.xlu0 %v1133, 64
      %v1205 = vpop.permute.xlu0 %1204
      %1206 = vrot.lane.b32.xlu0 %v1134, 64
      %v1207 = vpop.permute.xlu0 %1206
      %1208 = vrot.lane.b32.xlu0 %v1135, 64
      %v1209 = vpop.permute.xlu0 %1208
      %1210 = vrot.lane.b32.xlu0 %v1136, 64
      %v1211 = vpop.permute.xlu0 %1210
      %1237 = vst.msk [vmem:[#allocation3 + $0x18] sm:$0xff] %vm636, %v1163
      %1238 = vst.msk [vmem:[#allocation3 + $0x40] sm:$0xff] %vm636, %v1165
      %1239 = vst.msk [vmem:[#allocation3 + $0x68] sm:$0xff] %vm636, %v1167
      %1240 = vst.msk [vmem:[#allocation3 + $0x90] sm:$0xff] %vm636, %v1169
      %1241 = vst.msk [vmem:[#allocation3 + $0xb8] sm:$0xff] %vm636, %v1171
      %1242 = vst.msk [vmem:[#allocation3 + $0xe0] sm:$0xff] %vm636, %v1173
      %1243 = vst.msk [vmem:[#allocation3 + $0x108] sm:$0xff] %vm636, %v1175
      %1244 = vst.msk [vmem:[#allocation3 + $0x130] sm:$0xff] %vm636, %v1177
      %1245 = vst.msk [vmem:[#allocation3 + $0x158] sm:$0xff] %vm636, %v1179
      %1246 = vst.msk [vmem:[#allocation3 + $0x180] sm:$0xff] %vm636, %v1181
      %1247 = vst.msk [vmem:[#allocation3 + $0x1a8] sm:$0xff] %vm636, %v1183
      %1248 = vst.msk [vmem:[#allocation3 + $0x1d0] sm:$0xff] %vm636, %v1185
      %1249 = vst.msk [vmem:[#allocation3 + $0x1f8] sm:$0xff] %vm636, %v1187
      %1250 = vst.msk [vmem:[#allocation3 + $0x220] sm:$0xff] %vm636, %v1189
      %1251 = vst.msk [vmem:[#allocation3 + $0x248] sm:$0xff] %vm636, %v1191
      %1252 = vst.msk [vmem:[#allocation3 + $0x270] sm:$0xff] %vm636, %v1193
      %1253 = vst.msk [vmem:[#allocation3 + $0x298] sm:$0xff] %vm636, %v1195
      %1254 = vst.msk [vmem:[#allocation3 + $0x2c0] sm:$0xff] %vm636, %v1197
      %1255 = vst.msk [vmem:[#allocation3 + $0x2e8] sm:$0xff] %vm636, %v1199
      %1256 = vst.msk [vmem:[#allocation3 + $0x310] sm:$0xff] %vm636, %v1201
      %1257 = vst.msk [vmem:[#allocation3 + $0x338] sm:$0xff] %vm636, %v1203
      %1258 = vst.msk [vmem:[#allocation3 + $0x360] sm:$0xff] %vm636, %v1205
      %1259 = vst.msk [vmem:[#allocation3 + $0x388] sm:$0xff] %vm636, %v1207
      %1260 = vst.msk [vmem:[#allocation3 + $0x3b0] sm:$0xff] %vm636, %v1209
      %1261 = vst.msk [vmem:[#allocation3 + $0x3d8] sm:$0xff] %vm636, %v1211
      %v1262 = vld [vmem:[#allocation2 + $0x1e] sm:$0xff]
      %v1263 = vld [vmem:[#allocation2 + $0x26] sm:$0xff]
      %v1264 = vld [vmem:[#allocation2 + $0x2e] sm:$0xff]
      %v1265 = vld [vmem:[#allocation2 + $0x36] sm:$0xff]
      %v1266 = vld [vmem:[#allocation2 + $0x3e] sm:$0xff]
      %v1267 = vld [vmem:[#allocation2 + $0x46] sm:$0xff]
      %v1268 = vld [vmem:[#allocation2 + $0x4e] sm:$0xff]
      %v1269 = vld [vmem:[#allocation2 + $0x56] sm:$0xff]
      %v1270 = vld [vmem:[#allocation2 + $0x5e] sm:$0xff]
      %v1271 = vld [vmem:[#allocation2 + $0x66] sm:$0xff]
      %v1272 = vld [vmem:[#allocation2 + $0x6e] sm:$0xff]
      %v1273 = vld [vmem:[#allocation2 + $0x76] sm:$0xff]
      %v1274 = vld [vmem:[#allocation2 + $0x7e] sm:$0xff]
      %v1275 = vld [vmem:[#allocation2 + $0x86] sm:$0xff]
      %v1276 = vld [vmem:[#allocation2 + $0x8e] sm:$0xff]
      %v1277 = vld [vmem:[#allocation2 + $0x96] sm:$0xff]
      %v1278 = vld [vmem:[#allocation2 + $0x9e] sm:$0xff]
      %v1279 = vld [vmem:[#allocation2 + $0xa6] sm:$0xff]
      %v1280 = vld [vmem:[#allocation2 + $0xae] sm:$0xff]
      %v1281 = vld [vmem:[#allocation2 + $0xb6] sm:$0xff]
      %v1282 = vld [vmem:[#allocation2 + $0xbe] sm:$0xff]
      %v1283 = vld [vmem:[#allocation2 + $0xc6] sm:$0xff]
      %v1284 = vld [vmem:[#allocation2 + $0xce] sm:$0xff]
      %v1285 = vld [vmem:[#allocation2 + $0xd6] sm:$0xff]
      %v1286 = vld [vmem:[#allocation2 + $0xde] sm:$0xff]
      %1287 = vst.msk [vmem:[#allocation3 + $0x20] sm:$0xff] %vm435, %v1262
      %1288 = vst.msk [vmem:[#allocation3 + $0x48] sm:$0xff] %vm435, %v1263
      %1289 = vst.msk [vmem:[#allocation3 + $0x70] sm:$0xff] %vm435, %v1264
      %1290 = vst.msk [vmem:[#allocation3 + $0x98] sm:$0xff] %vm435, %v1265
      %1291 = vst.msk [vmem:[#allocation3 + $0xc0] sm:$0xff] %vm435, %v1266
      %1292 = vst.msk [vmem:[#allocation3 + $0xe8] sm:$0xff] %vm435, %v1267
      %1293 = vst.msk [vmem:[#allocation3 + $0x110] sm:$0xff] %vm435, %v1268
      %1294 = vst.msk [vmem:[#allocation3 + $0x138] sm:$0xff] %vm435, %v1269
      %1295 = vst.msk [vmem:[#allocation3 + $0x160] sm:$0xff] %vm435, %v1270
      %1296 = vst.msk [vmem:[#allocation3 + $0x188] sm:$0xff] %vm435, %v1271
      %1297 = vst.msk [vmem:[#allocation3 + $0x1b0] sm:$0xff] %vm435, %v1272
      %1298 = vst.msk [vmem:[#allocation3 + $0x1d8] sm:$0xff] %vm435, %v1273
      %1299 = vst.msk [vmem:[#allocation3 + $0x200] sm:$0xff] %vm435, %v1274
      %1300 = vst.msk [vmem:[#allocation3 + $0x228] sm:$0xff] %vm435, %v1275
      %1301 = vst.msk [vmem:[#allocation3 + $0x250] sm:$0xff] %vm435, %v1276
      %1302 = vst.msk [vmem:[#allocation3 + $0x278] sm:$0xff] %vm435, %v1277
      %1303 = vst.msk [vmem:[#allocation3 + $0x2a0] sm:$0xff] %vm435, %v1278
      %1304 = vst.msk [vmem:[#allocation3 + $0x2c8] sm:$0xff] %vm435, %v1279
      %1305 = vst.msk [vmem:[#allocation3 + $0x2f0] sm:$0xff] %vm435, %v1280
      %1306 = vst.msk [vmem:[#allocation3 + $0x318] sm:$0xff] %vm435, %v1281
      %1307 = vst.msk [vmem:[#allocation3 + $0x340] sm:$0xff] %vm435, %v1282
      %1308 = vst.msk [vmem:[#allocation3 + $0x368] sm:$0xff] %vm435, %v1283
      %1309 = vst.msk [vmem:[#allocation3 + $0x390] sm:$0xff] %vm435, %v1284
      %1310 = vst.msk [vmem:[#allocation3 + $0x3b8] sm:$0xff] %vm435, %v1285
      %1311 = vst.msk [vmem:[#allocation3 + $0x3e0] sm:$0xff] %vm435, %v1286
      %v1312 = vld [vmem:[#allocation3] sm:$0xff]
      %v1313 = vld [vmem:[#allocation3 + $0x8] sm:$0xff]
      %v1314 = vld [vmem:[#allocation3 + $0x10] sm:$0xff]
      %v1315 = vld [vmem:[#allocation3 + $0x18] sm:$0xff]
      %v1316 = vld [vmem:[#allocation3 + $0x20] sm:$0xff]
      %v1317 = vld [vmem:[#allocation3 + $0x28] sm:$0xff]
      %v1318 = vld [vmem:[#allocation3 + $0x30] sm:$0xff]
      %v1319 = vld [vmem:[#allocation3 + $0x38] sm:$0xff]
      %v1320 = vld [vmem:[#allocation3 + $0x40] sm:$0xff]
      %v1321 = vld [vmem:[#allocation3 + $0x48] sm:$0xff]
      %v1322 = vld [vmem:[#allocation3 + $0x50] sm:$0xff]
      %v1323 = vld [vmem:[#allocation3 + $0x58] sm:$0xff]
      %v1324 = vld [vmem:[#allocation3 + $0x60] sm:$0xff]
      %v1325 = vld [vmem:[#allocation3 + $0x68] sm:$0xff]
      %v1326 = vld [vmem:[#allocation3 + $0x70] sm:$0xff]
      %v1327 = vld [vmem:[#allocation3 + $0x78] sm:$0xff]
      %v1328 = vld [vmem:[#allocation3 + $0x80] sm:$0xff]
      %v1329 = vld [vmem:[#allocation3 + $0x88] sm:$0xff]
      %v1330 = vld [vmem:[#allocation3 + $0x90] sm:$0xff]
      %v1331 = vld [vmem:[#allocation3 + $0x98] sm:$0xff]
      %v1332 = vld [vmem:[#allocation3 + $0xa0] sm:$0xff]
      %v1333 = vld [vmem:[#allocation3 + $0xa8] sm:$0xff]
      %v1334 = vld [vmem:[#allocation3 + $0xb0] sm:$0xff]
      %v1335 = vld [vmem:[#allocation3 + $0xb8] sm:$0xff]
      %v1336 = vld [vmem:[#allocation3 + $0xc0] sm:$0xff]
      %v1337 = vld [vmem:[#allocation3 + $0xc8] sm:$0xff]
      %v1338 = vld [vmem:[#allocation3 + $0xd0] sm:$0xff]
      %v1339 = vld [vmem:[#allocation3 + $0xd8] sm:$0xff]
      %v1340 = vld [vmem:[#allocation3 + $0xe0] sm:$0xff]
      %v1341 = vld [vmem:[#allocation3 + $0xe8] sm:$0xff]
      %v1342 = vld [vmem:[#allocation3 + $0xf0] sm:$0xff]
      %v1343 = vld [vmem:[#allocation3 + $0xf8] sm:$0xff]
      %v1344 = vld [vmem:[#allocation3 + $0x100] sm:$0xff]
      %v1345 = vld [vmem:[#allocation3 + $0x108] sm:$0xff]
      %v1346 = vld [vmem:[#allocation3 + $0x110] sm:$0xff]
      %v1347 = vld [vmem:[#allocation3 + $0x118] sm:$0xff]
      %v1348 = vld [vmem:[#allocation3 + $0x120] sm:$0xff]
      %v1349 = vld [vmem:[#allocation3 + $0x128] sm:$0xff]
      %v1350 = vld [vmem:[#allocation3 + $0x130] sm:$0xff]
      %v1351 = vld [vmem:[#allocation3 + $0x138] sm:$0xff]
      %v1352 = vld [vmem:[#allocation3 + $0x140] sm:$0xff]
      %v1353 = vld [vmem:[#allocation3 + $0x148] sm:$0xff]
      %v1354 = vld [vmem:[#allocation3 + $0x150] sm:$0xff]
      %v1355 = vld [vmem:[#allocation3 + $0x158] sm:$0xff]
      %v1356 = vld [vmem:[#allocation3 + $0x160] sm:$0xff]
      %v1357 = vld [vmem:[#allocation3 + $0x168] sm:$0xff]
      %v1358 = vld [vmem:[#allocation3 + $0x170] sm:$0xff]
      %v1359 = vld [vmem:[#allocation3 + $0x178] sm:$0xff]
      %v1360 = vld [vmem:[#allocation3 + $0x180] sm:$0xff]
      %v1361 = vld [vmem:[#allocation3 + $0x188] sm:$0xff]
      %v1362 = vld [vmem:[#allocation3 + $0x190] sm:$0xff]
      %v1363 = vld [vmem:[#allocation3 + $0x198] sm:$0xff]
      %v1364 = vld [vmem:[#allocation3 + $0x1a0] sm:$0xff]
      %v1365 = vld [vmem:[#allocation3 + $0x1a8] sm:$0xff]
      %v1366 = vld [vmem:[#allocation3 + $0x1b0] sm:$0xff]
      %v1367 = vld [vmem:[#allocation3 + $0x1b8] sm:$0xff]
      %v1368 = vld [vmem:[#allocation3 + $0x1c0] sm:$0xff]
      %v1369 = vld [vmem:[#allocation3 + $0x1c8] sm:$0xff]
      %v1370 = vld [vmem:[#allocation3 + $0x1d0] sm:$0xff]
      %v1371 = vld [vmem:[#allocation3 + $0x1d8] sm:$0xff]
      %v1372 = vld [vmem:[#allocation3 + $0x1e0] sm:$0xff]
      %v1373 = vld [vmem:[#allocation3 + $0x1e8] sm:$0xff]
      %v1374 = vld [vmem:[#allocation3 + $0x1f0] sm:$0xff]
      %v1375 = vld [vmem:[#allocation3 + $0x1f8] sm:$0xff]
      %v1376 = vld [vmem:[#allocation3 + $0x200] sm:$0xff]
      %v1377 = vld [vmem:[#allocation3 + $0x208] sm:$0xff]
      %v1378 = vld [vmem:[#allocation3 + $0x210] sm:$0xff]
      %v1379 = vld [vmem:[#allocation3 + $0x218] sm:$0xff]
      %v1380 = vld [vmem:[#allocation3 + $0x220] sm:$0xff]
      %v1381 = vld [vmem:[#allocation3 + $0x228] sm:$0xff]
      %v1382 = vld [vmem:[#allocation3 + $0x230] sm:$0xff]
      %v1383 = vld [vmem:[#allocation3 + $0x238] sm:$0xff]
      %v1384 = vld [vmem:[#allocation3 + $0x240] sm:$0xff]
      %v1385 = vld [vmem:[#allocation3 + $0x248] sm:$0xff]
      %v1386 = vld [vmem:[#allocation3 + $0x250] sm:$0xff]
      %v1387 = vld [vmem:[#allocation3 + $0x258] sm:$0xff]
      %v1388 = vld [vmem:[#allocation3 + $0x260] sm:$0xff]
      %v1389 = vld [vmem:[#allocation3 + $0x268] sm:$0xff]
      %v1390 = vld [vmem:[#allocation3 + $0x270] sm:$0xff]
      %v1391 = vld [vmem:[#allocation3 + $0x278] sm:$0xff]
      %v1392 = vld [vmem:[#allocation3 + $0x280] sm:$0xff]
      %v1393 = vld [vmem:[#allocation3 + $0x288] sm:$0xff]
      %v1394 = vld [vmem:[#allocation3 + $0x290] sm:$0xff]
      %v1395 = vld [vmem:[#allocation3 + $0x298] sm:$0xff]
      %v1396 = vld [vmem:[#allocation3 + $0x2a0] sm:$0xff]
      %v1397 = vld [vmem:[#allocation3 + $0x2a8] sm:$0xff]
      %v1398 = vld [vmem:[#allocation3 + $0x2b0] sm:$0xff]
      %v1399 = vld [vmem:[#allocation3 + $0x2b8] sm:$0xff]
      %v1400 = vld [vmem:[#allocation3 + $0x2c0] sm:$0xff]
      %v1401 = vld [vmem:[#allocation3 + $0x2c8] sm:$0xff]
      %v1402 = vld [vmem:[#allocation3 + $0x2d0] sm:$0xff]
      %v1403 = vld [vmem:[#allocation3 + $0x2d8] sm:$0xff]
      %v1404 = vld [vmem:[#allocation3 + $0x2e0] sm:$0xff]
      %v1405 = vld [vmem:[#allocation3 + $0x2e8] sm:$0xff]
      %v1406 = vld [vmem:[#allocation3 + $0x2f0] sm:$0xff]
      %v1407 = vld [vmem:[#allocation3 + $0x2f8] sm:$0xff]
      %v1408 = vld [vmem:[#allocation3 + $0x300] sm:$0xff]
      %v1409 = vld [vmem:[#allocation3 + $0x308] sm:$0xff]
      %v1410 = vld [vmem:[#allocation3 + $0x310] sm:$0xff]
      %v1411 = vld [vmem:[#allocation3 + $0x318] sm:$0xff]
      %v1412 = vld [vmem:[#allocation3 + $0x320] sm:$0xff]
      %v1413 = vld [vmem:[#allocation3 + $0x328] sm:$0xff]
      %v1414 = vld [vmem:[#allocation3 + $0x330] sm:$0xff]
      %v1415 = vld [vmem:[#allocation3 + $0x338] sm:$0xff]
      %v1416 = vld [vmem:[#allocation3 + $0x340] sm:$0xff]
      %v1417 = vld [vmem:[#allocation3 + $0x348] sm:$0xff]
      %v1418 = vld [vmem:[#allocation3 + $0x350] sm:$0xff]
      %v1419 = vld [vmem:[#allocation3 + $0x358] sm:$0xff]
      %v1420 = vld [vmem:[#allocation3 + $0x360] sm:$0xff]
      %v1421 = vld [vmem:[#allocation3 + $0x368] sm:$0xff]
      %v1422 = vld [vmem:[#allocation3 + $0x370] sm:$0xff]
      %v1423 = vld [vmem:[#allocation3 + $0x378] sm:$0xff]
      %v1424 = vld [vmem:[#allocation3 + $0x380] sm:$0xff]
      %v1425 = vld [vmem:[#allocation3 + $0x388] sm:$0xff]
      %v1426 = vld [vmem:[#allocation3 + $0x390] sm:$0xff]
      %v1427 = vld [vmem:[#allocation3 + $0x398] sm:$0xff]
      %v1428 = vld [vmem:[#allocation3 + $0x3a0] sm:$0xff]
      %v1429 = vld [vmem:[#allocation3 + $0x3a8] sm:$0xff]
      %v1430 = vld [vmem:[#allocation3 + $0x3b0] sm:$0xff]
      %v1431 = vld [vmem:[#allocation3 + $0x3b8] sm:$0xff]
      %v1432 = vld [vmem:[#allocation3 + $0x3c0] sm:$0xff]
      %v1433 = vld [vmem:[#allocation3 + $0x3c8] sm:$0xff]
      %v1434 = vld [vmem:[#allocation3 + $0x3d0] sm:$0xff]
      %v1435 = vld [vmem:[#allocation3 + $0x3d8] sm:$0xff]
      %v1436 = vld [vmem:[#allocation3 + $0x3e0] sm:$0xff]
      %v1437 = vld [vmem:[%s3] sm:$0xff]
      %v1438 = vld [vmem:[%s3 + $0x8] sm:$0xff]
      %v1439 = vld [vmem:[%s3 + $0x10] sm:$0xff]
      %v1440 = vld [vmem:[%s3 + $0x18] sm:$0xff]
      %v1441 = vld [vmem:[%s3 + $0x20] sm:$0xff]
      %v1442 = vld [vmem:[%s3 + $0x28] sm:$0xff]
      %v1443 = vld [vmem:[%s3 + $0x30] sm:$0xff]
      %v1444 = vld [vmem:[%s3 + $0x38] sm:$0xff]
      %v1445 = vld [vmem:[%s3 + $0x40] sm:$0xff]
      %v1446 = vld [vmem:[%s3 + $0x48] sm:$0xff]
      %v1447 = vld [vmem:[%s3 + $0x50] sm:$0xff]
      %v1448 = vld [vmem:[%s3 + $0x58] sm:$0xff]
      %v1449 = vld [vmem:[%s3 + $0x60] sm:$0xff]
      %v1450 = vld [vmem:[%s3 + $0x68] sm:$0xff]
      %v1451 = vld [vmem:[%s3 + $0x70] sm:$0xff]
      %v1452 = vld [vmem:[%s3 + $0x78] sm:$0xff]
      %v1453 = vld [vmem:[%s3 + $0x80] sm:$0xff]
      %v1454 = vld [vmem:[%s3 + $0x88] sm:$0xff]
      %v1455 = vld [vmem:[%s3 + $0x90] sm:$0xff]
      %v1456 = vld [vmem:[%s3 + $0x98] sm:$0xff]
      %v1457 = vld [vmem:[%s3 + $0xa0] sm:$0xff]
      %v1458 = vld [vmem:[%s3 + $0xa8] sm:$0xff]
      %v1459 = vld [vmem:[%s3 + $0xb0] sm:$0xff]
      %v1460 = vld [vmem:[%s3 + $0xb8] sm:$0xff]
      %v1461 = vld [vmem:[%s3 + $0xc0] sm:$0xff]
      %v1462 = vld [vmem:[%s3 + $0xc8] sm:$0xff]
      %v1463 = vld [vmem:[%s3 + $0xd0] sm:$0xff]
      %v1464 = vld [vmem:[%s3 + $0xd8] sm:$0xff]
      %v1465 = vld [vmem:[%s3 + $0xe0] sm:$0xff]
      %v1466 = vld [vmem:[%s3 + $0xe8] sm:$0xff]
      %v1467 = vld [vmem:[%s3 + $0xf0] sm:$0xff]
      %v1468 = vld [vmem:[%s3 + $0xf8] sm:$0xff]
      %v1469 = vld [vmem:[%s3 + $0x100] sm:$0xff]
      %v1470 = vld [vmem:[%s3 + $0x108] sm:$0xff]
      %v1471 = vld [vmem:[%s3 + $0x110] sm:$0xff]
      %v1472 = vld [vmem:[%s3 + $0x118] sm:$0xff]
      %v1473 = vld [vmem:[%s3 + $0x120] sm:$0xff]
      %v1474 = vld [vmem:[%s3 + $0x128] sm:$0xff]
      %v1475 = vld [vmem:[%s3 + $0x130] sm:$0xff]
      %v1476 = vld [vmem:[%s3 + $0x138] sm:$0xff]
      %v1477 = vld [vmem:[%s3 + $0x140] sm:$0xff]
      %v1478 = vld [vmem:[%s3 + $0x148] sm:$0xff]
      %v1479 = vld [vmem:[%s3 + $0x150] sm:$0xff]
      %v1480 = vld [vmem:[%s3 + $0x158] sm:$0xff]
      %v1481 = vld [vmem:[%s3 + $0x160] sm:$0xff]
      %v1482 = vld [vmem:[%s3 + $0x168] sm:$0xff]
      %v1483 = vld [vmem:[%s3 + $0x170] sm:$0xff]
      %v1484 = vld [vmem:[%s3 + $0x178] sm:$0xff]
      %v1485 = vld [vmem:[%s3 + $0x180] sm:$0xff]
      %v1486 = vld [vmem:[%s3 + $0x188] sm:$0xff]
      %v1487 = vld [vmem:[%s3 + $0x190] sm:$0xff]
      %v1488 = vld [vmem:[%s3 + $0x198] sm:$0xff]
      %v1489 = vld [vmem:[%s3 + $0x1a0] sm:$0xff]
      %v1490 = vld [vmem:[%s3 + $0x1a8] sm:$0xff]
      %v1491 = vld [vmem:[%s3 + $0x1b0] sm:$0xff]
      %v1492 = vld [vmem:[%s3 + $0x1b8] sm:$0xff]
      %v1493 = vld [vmem:[%s3 + $0x1c0] sm:$0xff]
      %v1494 = vld [vmem:[%s3 + $0x1c8] sm:$0xff]
      %v1495 = vld [vmem:[%s3 + $0x1d0] sm:$0xff]
      %v1496 = vld [vmem:[%s3 + $0x1d8] sm:$0xff]
      %v1497 = vld [vmem:[%s3 + $0x1e0] sm:$0xff]
      %v1498 = vld [vmem:[%s3 + $0x1e8] sm:$0xff]
      %v1499 = vld [vmem:[%s3 + $0x1f0] sm:$0xff]
      %v1500 = vld [vmem:[%s3 + $0x1f8] sm:$0xff]
      %v1501 = vld [vmem:[%s3 + $0x200] sm:$0xff]
      %v1502 = vld [vmem:[%s3 + $0x208] sm:$0xff]
      %v1503 = vld [vmem:[%s3 + $0x210] sm:$0xff]
      %v1504 = vld [vmem:[%s3 + $0x218] sm:$0xff]
      %v1505 = vld [vmem:[%s3 + $0x220] sm:$0xff]
      %v1506 = vld [vmem:[%s3 + $0x228] sm:$0xff]
      %v1507 = vld [vmem:[%s3 + $0x230] sm:$0xff]
      %v1508 = vld [vmem:[%s3 + $0x238] sm:$0xff]
      %v1509 = vld [vmem:[%s4] sm:$0x1]
      %v1511 = vperm.slane %v1509, 0
      %v1514 = vsel %vm435, %v1316, 0
      %v1517 = vsel %vm435, %v1321, 0
      %v1520 = vsel %vm435, %v1326, 0
      %v1523 = vsel %vm435, %v1331, 0
      %v1526 = vsel %vm435, %v1336, 0
      %v1529 = vsel %vm435, %v1341, 0
      %v1532 = vsel %vm435, %v1346, 0
      %v1535 = vsel %vm435, %v1351, 0
      %v1538 = vsel %vm435, %v1356, 0
      %v1541 = vsel %vm435, %v1361, 0
      %v1544 = vsel %vm435, %v1366, 0
      %v1547 = vsel %vm435, %v1371, 0
      %v1550 = vsel %vm435, %v1376, 0
      %v1553 = vsel %vm435, %v1381, 0
      %v1556 = vsel %vm435, %v1386, 0
      %v1559 = vsel %vm435, %v1391, 0
      %v1562 = vsel %vm435, %v1396, 0
      %v1565 = vsel %vm435, %v1401, 0
      %v1568 = vsel %vm435, %v1406, 0
      %v1571 = vsel %vm435, %v1411, 0
      %v1574 = vsel %vm435, %v1416, 0
      %v1577 = vsel %vm435, %v1421, 0
      %v1580 = vsel %vm435, %v1426, 0
      %v1583 = vsel %vm435, %v1431, 0
      %v1586 = vsel %vm435, %v1436, 0
      %1588 = vmatpush.msra.mxu0 %v1452
      %1589 = vmatpush.msra.mxu0 %v1451
      %1590 = vmatpush.msra.mxu0 %v1450
      %1591 = vmatpush.msra.mxu0 %v1449
      %1592 = vmatpush.msra.mxu0 %v1448
      %1593 = vmatpush.msra.mxu0 %v1447
      %1594 = vmatpush.msra.mxu0 %v1446
      %1595 = vmatpush.msra.mxu0 %v1445
      %1596 = vmatpush.msra.mxu0 %v1444
      %1597 = vmatpush.msra.mxu0 %v1443
      %1598 = vmatpush.msra.mxu0 %v1442
      %1599 = vmatpush.msra.mxu0 %v1441
      %1600 = vmatpush.msra.mxu0 %v1440
      %1601 = vmatpush.msra.mxu0 %v1439
      %1602 = vmatpush.msra.mxu0 %v1438
      %1603 = vmatpush.msra.mxu0 %v1437
      %1604 = vmatmul.f32.gmra.mxu0 %v1312
      %v1605 = vpop.f32.mrf.mxu0
      %v1606 = vadd.f32 %v1511, %v1605
      %1607 = vmatmul.f32.gmra.mxu0 %v1317
      %v1608 = vpop.f32.mrf.mxu0
      %v1609 = vadd.f32 %v1511, %v1608
      %1610 = vmatmul.f32.gmra.mxu0 %v1322
      %v1611 = vpop.f32.mrf.mxu0
      %v1612 = vadd.f32 %v1511, %v1611
      %1613 = vmatmul.f32.gmra.mxu0 %v1327
      %v1614 = vpop.f32.mrf.mxu0
      %v1615 = vadd.f32 %v1511, %v1614
      %1616 = vmatmul.f32.gmra.mxu0 %v1332
      %v1617 = vpop.f32.mrf.mxu0
      %v1618 = vadd.f32 %v1511, %v1617
      %1619 = vmatmul.f32.gmra.mxu0 %v1337
      %v1620 = vpop.f32.mrf.mxu0
      %v1621 = vadd.f32 %v1511, %v1620
      %1622 = vmatmul.f32.gmra.mxu0 %v1342
      %v1623 = vpop.f32.mrf.mxu0
      %v1624 = vadd.f32 %v1511, %v1623
      %1625 = vmatmul.f32.gmra.mxu0 %v1347
      %v1626 = vpop.f32.mrf.mxu0
      %v1627 = vadd.f32 %v1511, %v1626
      %1628 = vmatmul.f32.gmra.mxu0 %v1352
      %v1629 = vpop.f32.mrf.mxu0
      %v1630 = vadd.f32 %v1511, %v1629
      %1631 = vmatmul.f32.gmra.mxu0 %v1357
      %v1632 = vpop.f32.mrf.mxu0
      %v1633 = vadd.f32 %v1511, %v1632
      %1634 = vmatmul.f32.gmra.mxu0 %v1362
      %v1635 = vpop.f32.mrf.mxu0
      %v1636 = vadd.f32 %v1511, %v1635
      %1637 = vmatmul.f32.gmra.mxu0 %v1367
      %v1638 = vpop.f32.mrf.mxu0
      %v1639 = vadd.f32 %v1511, %v1638
      %1640 = vmatmul.f32.gmra.mxu0 %v1372
      %v1641 = vpop.f32.mrf.mxu0
      %v1642 = vadd.f32 %v1511, %v1641
      %1643 = vmatmul.f32.gmra.mxu0 %v1377
      %v1644 = vpop.f32.mrf.mxu0
      %v1645 = vadd.f32 %v1511, %v1644
      %1646 = vmatmul.f32.gmra.mxu0 %v1382
      %v1647 = vpop.f32.mrf.mxu0
      %v1648 = vadd.f32 %v1511, %v1647
      %1649 = vmatmul.f32.gmra.mxu0 %v1387
      %v1650 = vpop.f32.mrf.mxu0
      %v1651 = vadd.f32 %v1511, %v1650
      %1652 = vmatmul.f32.gmra.mxu0 %v1392
      %v1653 = vpop.f32.mrf.mxu0
      %v1654 = vadd.f32 %v1511, %v1653
      %1655 = vmatmul.f32.gmra.mxu0 %v1397
      %v1656 = vpop.f32.mrf.mxu0
      %v1657 = vadd.f32 %v1511, %v1656
      %1658 = vmatmul.f32.gmra.mxu0 %v1402
      %v1659 = vpop.f32.mrf.mxu0
      %v1660 = vadd.f32 %v1511, %v1659
      %1661 = vmatmul.f32.gmra.mxu0 %v1407
      %v1662 = vpop.f32.mrf.mxu0
      %v1663 = vadd.f32 %v1511, %v1662
      %1664 = vmatmul.f32.gmra.mxu0 %v1412
      %v1665 = vpop.f32.mrf.mxu0
      %v1666 = vadd.f32 %v1511, %v1665
      %1667 = vmatmul.f32.gmra.mxu0 %v1417
      %v1668 = vpop.f32.mrf.mxu0
      %v1669 = vadd.f32 %v1511, %v1668
      %1670 = vmatmul.f32.gmra.mxu0 %v1422
      %v1671 = vpop.f32.mrf.mxu0
      %v1672 = vadd.f32 %v1511, %v1671
      %1673 = vmatmul.f32.gmra.mxu0 %v1427
      %v1674 = vpop.f32.mrf.mxu0
      %v1675 = vadd.f32 %v1511, %v1674
      %1676 = vmatmul.f32.gmra.mxu0 %v1432
      %v1677 = vpop.f32.mrf.mxu0
      %v1678 = vadd.f32 %v1511, %v1677
      %1679 = vdwg.mxu0
      %1680 = vmatpush.msra.mxu0 %v1468
      %1681 = vmatpush.msra.mxu0 %v1467
      %1682 = vmatpush.msra.mxu0 %v1466
      %1683 = vmatpush.msra.mxu0 %v1465
      %1684 = vmatpush.msra.mxu0 %v1464
      %1685 = vmatpush.msra.mxu0 %v1463
      %1686 = vmatpush.msra.mxu0 %v1462
      %1687 = vmatpush.msra.mxu0 %v1461
      %1688 = vmatpush.msra.mxu0 %v1460
      %1689 = vmatpush.msra.mxu0 %v1459
      %1690 = vmatpush.msra.mxu0 %v1458
      %1691 = vmatpush.msra.mxu0 %v1457
      %1692 = vmatpush.msra.mxu0 %v1456
      %1693 = vmatpush.msra.mxu0 %v1455
      %1694 = vmatpush.msra.mxu0 %v1454
      %1695 = vmatpush.msra.mxu0 %v1453
      %1696 = vmatmul.f32.gmra.mxu0 %v1313
      %v1697 = vpop.f32.mrf.mxu0
      %v1698 = vadd.f32 %v1606, %v1697
      %1699 = vmatmul.f32.gmra.mxu0 %v1318
      %v1700 = vpop.f32.mrf.mxu0
      %v1701 = vadd.f32 %v1609, %v1700
      %1702 = vmatmul.f32.gmra.mxu0 %v1323
      %v1703 = vpop.f32.mrf.mxu0
      %v1704 = vadd.f32 %v1612, %v1703
      %1705 = vmatmul.f32.gmra.mxu0 %v1328
      %v1706 = vpop.f32.mrf.mxu0
      %v1707 = vadd.f32 %v1615, %v1706
      %1708 = vmatmul.f32.gmra.mxu0 %v1333
      %v1709 = vpop.f32.mrf.mxu0
      %v1710 = vadd.f32 %v1618, %v1709
      %1711 = vmatmul.f32.gmra.mxu0 %v1338
      %v1712 = vpop.f32.mrf.mxu0
      %v1713 = vadd.f32 %v1621, %v1712
      %1714 = vmatmul.f32.gmra.mxu0 %v1343
      %v1715 = vpop.f32.mrf.mxu0
      %v1716 = vadd.f32 %v1624, %v1715
      %1717 = vmatmul.f32.gmra.mxu0 %v1348
      %v1718 = vpop.f32.mrf.mxu0
      %v1719 = vadd.f32 %v1627, %v1718
      %1720 = vmatmul.f32.gmra.mxu0 %v1353
      %v1721 = vpop.f32.mrf.mxu0
      %v1722 = vadd.f32 %v1630, %v1721
      %1723 = vmatmul.f32.gmra.mxu0 %v1358
      %v1724 = vpop.f32.mrf.mxu0
      %v1725 = vadd.f32 %v1633, %v1724
      %1726 = vmatmul.f32.gmra.mxu0 %v1363
      %v1727 = vpop.f32.mrf.mxu0
      %v1728 = vadd.f32 %v1636, %v1727
      %1729 = vmatmul.f32.gmra.mxu0 %v1368
      %v1730 = vpop.f32.mrf.mxu0
      %v1731 = vadd.f32 %v1639, %v1730
      %1732 = vmatmul.f32.gmra.mxu0 %v1373
      %v1733 = vpop.f32.mrf.mxu0
      %v1734 = vadd.f32 %v1642, %v1733
      %1735 = vmatmul.f32.gmra.mxu0 %v1378
      %v1736 = vpop.f32.mrf.mxu0
      %v1737 = vadd.f32 %v1645, %v1736
      %1738 = vmatmul.f32.gmra.mxu0 %v1383
      %v1739 = vpop.f32.mrf.mxu0
      %v1740 = vadd.f32 %v1648, %v1739
      %1741 = vmatmul.f32.gmra.mxu0 %v1388
      %v1742 = vpop.f32.mrf.mxu0
      %v1743 = vadd.f32 %v1651, %v1742
      %1744 = vmatmul.f32.gmra.mxu0 %v1393
      %v1745 = vpop.f32.mrf.mxu0
      %v1746 = vadd.f32 %v1654, %v1745
      %1747 = vmatmul.f32.gmra.mxu0 %v1398
      %v1748 = vpop.f32.mrf.mxu0
      %v1749 = vadd.f32 %v1657, %v1748
      %1750 = vmatmul.f32.gmra.mxu0 %v1403
      %v1751 = vpop.f32.mrf.mxu0
      %v1752 = vadd.f32 %v1660, %v1751
      %1753 = vmatmul.f32.gmra.mxu0 %v1408
      %v1754 = vpop.f32.mrf.mxu0
      %v1755 = vadd.f32 %v1663, %v1754
      %1756 = vmatmul.f32.gmra.mxu0 %v1413
      %v1757 = vpop.f32.mrf.mxu0
      %v1758 = vadd.f32 %v1666, %v1757
      %1759 = vmatmul.f32.gmra.mxu0 %v1418
      %v1760 = vpop.f32.mrf.mxu0
      %v1761 = vadd.f32 %v1669, %v1760
      %1762 = vmatmul.f32.gmra.mxu0 %v1423
      %v1763 = vpop.f32.mrf.mxu0
      %v1764 = vadd.f32 %v1672, %v1763
      %1765 = vmatmul.f32.gmra.mxu0 %v1428
      %v1766 = vpop.f32.mrf.mxu0
      %v1767 = vadd.f32 %v1675, %v1766
      %1768 = vmatmul.f32.gmra.mxu0 %v1433
      %v1769 = vpop.f32.mrf.mxu0
      %v1770 = vadd.f32 %v1678, %v1769
      %1771 = vdwg.mxu0
      %1772 = vmatpush.msra.mxu0 %v1484
      %1773 = vmatpush.msra.mxu0 %v1483
      %1774 = vmatpush.msra.mxu0 %v1482
      %1775 = vmatpush.msra.mxu0 %v1481
      %1776 = vmatpush.msra.mxu0 %v1480
      %1777 = vmatpush.msra.mxu0 %v1479
      %1778 = vmatpush.msra.mxu0 %v1478
      %1779 = vmatpush.msra.mxu0 %v1477
      %1780 = vmatpush.msra.mxu0 %v1476
      %1781 = vmatpush.msra.mxu0 %v1475
      %1782 = vmatpush.msra.mxu0 %v1474
      %1783 = vmatpush.msra.mxu0 %v1473
      %1784 = vmatpush.msra.mxu0 %v1472
      %1785 = vmatpush.msra.mxu0 %v1471
      %1786 = vmatpush.msra.mxu0 %v1470
      %1787 = vmatpush.msra.mxu0 %v1469
      %1788 = vmatmul.f32.gmra.mxu0 %v1314
      %v1789 = vpop.f32.mrf.mxu0
      %v1790 = vadd.f32 %v1698, %v1789
      %1791 = vmatmul.f32.gmra.mxu0 %v1319
      %v1792 = vpop.f32.mrf.mxu0
      %v1793 = vadd.f32 %v1701, %v1792
      %1794 = vmatmul.f32.gmra.mxu0 %v1324
      %v1795 = vpop.f32.mrf.mxu0
      %v1796 = vadd.f32 %v1704, %v1795
      %1797 = vmatmul.f32.gmra.mxu0 %v1329
      %v1798 = vpop.f32.mrf.mxu0
      %v1799 = vadd.f32 %v1707, %v1798
      %1800 = vmatmul.f32.gmra.mxu0 %v1334
      %v1801 = vpop.f32.mrf.mxu0
      %v1802 = vadd.f32 %v1710, %v1801
      %1803 = vmatmul.f32.gmra.mxu0 %v1339
      %v1804 = vpop.f32.mrf.mxu0
      %v1805 = vadd.f32 %v1713, %v1804
      %1806 = vmatmul.f32.gmra.mxu0 %v1344
      %v1807 = vpop.f32.mrf.mxu0
      %v1808 = vadd.f32 %v1716, %v1807
      %1809 = vmatmul.f32.gmra.mxu0 %v1349
      %v1810 = vpop.f32.mrf.mxu0
      %v1811 = vadd.f32 %v1719, %v1810
      %1812 = vmatmul.f32.gmra.mxu0 %v1354
      %v1813 = vpop.f32.mrf.mxu0
      %v1814 = vadd.f32 %v1722, %v1813
      %1815 = vmatmul.f32.gmra.mxu0 %v1359
      %v1816 = vpop.f32.mrf.mxu0
      %v1817 = vadd.f32 %v1725, %v1816
      %1818 = vmatmul.f32.gmra.mxu0 %v1364
      %v1819 = vpop.f32.mrf.mxu0
      %v1820 = vadd.f32 %v1728, %v1819
      %1821 = vmatmul.f32.gmra.mxu0 %v1369
      %v1822 = vpop.f32.mrf.mxu0
      %v1823 = vadd.f32 %v1731, %v1822
      %1824 = vmatmul.f32.gmra.mxu0 %v1374
      %v1825 = vpop.f32.mrf.mxu0
      %v1826 = vadd.f32 %v1734, %v1825
      %1827 = vmatmul.f32.gmra.mxu0 %v1379
      %v1828 = vpop.f32.mrf.mxu0
      %v1829 = vadd.f32 %v1737, %v1828
      %1830 = vmatmul.f32.gmra.mxu0 %v1384
      %v1831 = vpop.f32.mrf.mxu0
      %v1832 = vadd.f32 %v1740, %v1831
      %1833 = vmatmul.f32.gmra.mxu0 %v1389
      %v1834 = vpop.f32.mrf.mxu0
      %v1835 = vadd.f32 %v1743, %v1834
      %1836 = vmatmul.f32.gmra.mxu0 %v1394
      %v1837 = vpop.f32.mrf.mxu0
      %v1838 = vadd.f32 %v1746, %v1837
      %1839 = vmatmul.f32.gmra.mxu0 %v1399
      %v1840 = vpop.f32.mrf.mxu0
      %v1841 = vadd.f32 %v1749, %v1840
      %1842 = vmatmul.f32.gmra.mxu0 %v1404
      %v1843 = vpop.f32.mrf.mxu0
      %v1844 = vadd.f32 %v1752, %v1843
      %1845 = vmatmul.f32.gmra.mxu0 %v1409
      %v1846 = vpop.f32.mrf.mxu0
      %v1847 = vadd.f32 %v1755, %v1846
      %1848 = vmatmul.f32.gmra.mxu0 %v1414
      %v1849 = vpop.f32.mrf.mxu0
      %v1850 = vadd.f32 %v1758, %v1849
      %1851 = vmatmul.f32.gmra.mxu0 %v1419
      %v1852 = vpop.f32.mrf.mxu0
      %v1853 = vadd.f32 %v1761, %v1852
      %1854 = vmatmul.f32.gmra.mxu0 %v1424
      %v1855 = vpop.f32.mrf.mxu0
      %v1856 = vadd.f32 %v1764, %v1855
      %1857 = vmatmul.f32.gmra.mxu0 %v1429
      %v1858 = vpop.f32.mrf.mxu0
      %v1859 = vadd.f32 %v1767, %v1858
      %1860 = vmatmul.f32.gmra.mxu0 %v1434
      %v1861 = vpop.f32.mrf.mxu0
      %v1862 = vadd.f32 %v1770, %v1861
      %1863 = vdwg.mxu0
      %1864 = vmatpush.msra.mxu0 %v1500
      %1865 = vmatpush.msra.mxu0 %v1499
      %1866 = vmatpush.msra.mxu0 %v1498
      %1867 = vmatpush.msra.mxu0 %v1497
      %1868 = vmatpush.msra.mxu0 %v1496
      %1869 = vmatpush.msra.mxu0 %v1495
      %1870 = vmatpush.msra.mxu0 %v1494
      %1871 = vmatpush.msra.mxu0 %v1493
      %1872 = vmatpush.msra.mxu0 %v1492
      %1873 = vmatpush.msra.mxu0 %v1491
      %1874 = vmatpush.msra.mxu0 %v1490
      %1875 = vmatpush.msra.mxu0 %v1489
      %1876 = vmatpush.msra.mxu0 %v1488
      %1877 = vmatpush.msra.mxu0 %v1487
      %1878 = vmatpush.msra.mxu0 %v1486
      %1879 = vmatpush.msra.mxu0 %v1485
      %1880 = vmatmul.f32.gmra.mxu0 %v1315
      %v1881 = vpop.f32.mrf.mxu0
      %v1882 = vadd.f32 %v1790, %v1881
      %1883 = vmatmul.f32.gmra.mxu0 %v1320
      %v1884 = vpop.f32.mrf.mxu0
      %v1885 = vadd.f32 %v1793, %v1884
      %1886 = vmatmul.f32.gmra.mxu0 %v1325
      %v1887 = vpop.f32.mrf.mxu0
      %v1888 = vadd.f32 %v1796, %v1887
      %1889 = vmatmul.f32.gmra.mxu0 %v1330
      %v1890 = vpop.f32.mrf.mxu0
      %v1891 = vadd.f32 %v1799, %v1890
      %1892 = vmatmul.f32.gmra.mxu0 %v1335
      %v1893 = vpop.f32.mrf.mxu0
      %v1894 = vadd.f32 %v1802, %v1893
      %1895 = vmatmul.f32.gmra.mxu0 %v1340
      %v1896 = vpop.f32.mrf.mxu0
      %v1897 = vadd.f32 %v1805, %v1896
      %1898 = vmatmul.f32.gmra.mxu0 %v1345
      %v1899 = vpop.f32.mrf.mxu0
      %v1900 = vadd.f32 %v1808, %v1899
      %1901 = vmatmul.f32.gmra.mxu0 %v1350
      %v1902 = vpop.f32.mrf.mxu0
      %v1903 = vadd.f32 %v1811, %v1902
      %1904 = vmatmul.f32.gmra.mxu0 %v1355
      %v1905 = vpop.f32.mrf.mxu0
      %v1906 = vadd.f32 %v1814, %v1905
      %1907 = vmatmul.f32.gmra.mxu0 %v1360
      %v1908 = vpop.f32.mrf.mxu0
      %v1909 = vadd.f32 %v1817, %v1908
      %1910 = vmatmul.f32.gmra.mxu0 %v1365
      %v1911 = vpop.f32.mrf.mxu0
      %v1912 = vadd.f32 %v1820, %v1911
      %1913 = vmatmul.f32.gmra.mxu0 %v1370
      %v1914 = vpop.f32.mrf.mxu0
      %v1915 = vadd.f32 %v1823, %v1914
      %1916 = vmatmul.f32.gmra.mxu0 %v1375
      %v1917 = vpop.f32.mrf.mxu0
      %v1918 = vadd.f32 %v1826, %v1917
      %1919 = vmatmul.f32.gmra.mxu0 %v1380
      %v1920 = vpop.f32.mrf.mxu0
      %v1921 = vadd.f32 %v1829, %v1920
      %1922 = vmatmul.f32.gmra.mxu0 %v1385
      %v1923 = vpop.f32.mrf.mxu0
      %v1924 = vadd.f32 %v1832, %v1923
      %1925 = vmatmul.f32.gmra.mxu0 %v1390
      %v1926 = vpop.f32.mrf.mxu0
      %v1927 = vadd.f32 %v1835, %v1926
      %1928 = vmatmul.f32.gmra.mxu0 %v1395
      %v1929 = vpop.f32.mrf.mxu0
      %v1930 = vadd.f32 %v1838, %v1929
      %1931 = vmatmul.f32.gmra.mxu0 %v1400
      %v1932 = vpop.f32.mrf.mxu0
      %v1933 = vadd.f32 %v1841, %v1932
      %1934 = vmatmul.f32.gmra.mxu0 %v1405
      %v1935 = vpop.f32.mrf.mxu0
      %v1936 = vadd.f32 %v1844, %v1935
      %1937 = vmatmul.f32.gmra.mxu0 %v1410
      %v1938 = vpop.f32.mrf.mxu0
      %v1939 = vadd.f32 %v1847, %v1938
      %1940 = vmatmul.f32.gmra.mxu0 %v1415
      %v1941 = vpop.f32.mrf.mxu0
      %v1942 = vadd.f32 %v1850, %v1941
      %1943 = vmatmul.f32.gmra.mxu0 %v1420
      %v1944 = vpop.f32.mrf.mxu0
      %v1945 = vadd.f32 %v1853, %v1944
      %1946 = vmatmul.f32.gmra.mxu0 %v1425
      %v1947 = vpop.f32.mrf.mxu0
      %v1948 = vadd.f32 %v1856, %v1947
      %1949 = vmatmul.f32.gmra.mxu0 %v1430
      %v1950 = vpop.f32.mrf.mxu0
      %v1951 = vadd.f32 %v1859, %v1950
      %1952 = vmatmul.f32.gmra.mxu0 %v1435
      %v1953 = vpop.f32.mrf.mxu0
      %v1954 = vadd.f32 %v1862, %v1953
      %1955 = vdwg.mxu0
      %1956 = vmatpush.msra.mxu0 0.0
      %1957 = vmatpush.msra.mxu0 0.0
      %1958 = vmatpush.msra.mxu0 0.0
      %1959 = vmatpush.msra.mxu0 0.0
      %1960 = vmatpush.msra.mxu0 0.0
      %1961 = vmatpush.msra.mxu0 0.0
      %1962 = vmatpush.msra.mxu0 0.0
      %1963 = vmatpush.msra.mxu0 0.0
      %1964 = vmatpush.msra.mxu0 %v1508
      %1965 = vmatpush.msra.mxu0 %v1507
      %1966 = vmatpush.msra.mxu0 %v1506
      %1967 = vmatpush.msra.mxu0 %v1505
      %1968 = vmatpush.msra.mxu0 %v1504
      %1969 = vmatpush.msra.mxu0 %v1503
      %1970 = vmatpush.msra.mxu0 %v1502
      %1971 = vmatpush.msra.mxu0 %v1501
      %1972 = vmatmul.f32.gmra.mxu0 %v1514
      %v1973 = vpop.f32.mrf.mxu0
      %v1974 = vadd.f32 %v1882, %v1973
      %1975 = vmatmul.f32.gmra.mxu0 %v1517
      %v1976 = vpop.f32.mrf.mxu0
      %v1977 = vadd.f32 %v1885, %v1976
      %1978 = vmatmul.f32.gmra.mxu0 %v1520
      %v1979 = vpop.f32.mrf.mxu0
      %v1980 = vadd.f32 %v1888, %v1979
      %1981 = vmatmul.f32.gmra.mxu0 %v1523
      %v1982 = vpop.f32.mrf.mxu0
      %v1983 = vadd.f32 %v1891, %v1982
      %1984 = vmatmul.f32.gmra.mxu0 %v1526
      %v1985 = vpop.f32.mrf.mxu0
      %v1986 = vadd.f32 %v1894, %v1985
      %1987 = vmatmul.f32.gmra.mxu0 %v1529
      %v1988 = vpop.f32.mrf.mxu0
      %v1989 = vadd.f32 %v1897, %v1988
      %1990 = vmatmul.f32.gmra.mxu0 %v1532
      %v1991 = vpop.f32.mrf.mxu0
      %v1992 = vadd.f32 %v1900, %v1991
      %1993 = vmatmul.f32.gmra.mxu0 %v1535
      %v1994 = vpop.f32.mrf.mxu0
      %v1995 = vadd.f32 %v1903, %v1994
      %1996 = vmatmul.f32.gmra.mxu0 %v1538
      %v1997 = vpop.f32.mrf.mxu0
      %v1998 = vadd.f32 %v1906, %v1997
      %1999 = vmatmul.f32.gmra.mxu0 %v1541
      %v2000 = vpop.f32.mrf.mxu0
      %v2001 = vadd.f32 %v1909, %v2000
      %2002 = vmatmul.f32.gmra.mxu0 %v1544
      %v2003 = vpop.f32.mrf.mxu0
      %v2004 = vadd.f32 %v1912, %v2003
      %2005 = vmatmul.f32.gmra.mxu0 %v1547
      %v2006 = vpop.f32.mrf.mxu0
      %v2007 = vadd.f32 %v1915, %v2006
      %2008 = vmatmul.f32.gmra.mxu0 %v1550
      %v2009 = vpop.f32.mrf.mxu0
      %v2010 = vadd.f32 %v1918, %v2009
      %2011 = vmatmul.f32.gmra.mxu0 %v1553
      %v2012 = vpop.f32.mrf.mxu0
      %v2013 = vadd.f32 %v1921, %v2012
      %2014 = vmatmul.f32.gmra.mxu0 %v1556
      %v2015 = vpop.f32.mrf.mxu0
      %v2016 = vadd.f32 %v1924, %v2015
      %2017 = vmatmul.f32.gmra.mxu0 %v1559
      %v2018 = vpop.f32.mrf.mxu0
      %v2019 = vadd.f32 %v1927, %v2018
      %2020 = vmatmul.f32.gmra.mxu0 %v1562
      %v2021 = vpop.f32.mrf.mxu0
      %v2022 = vadd.f32 %v1930, %v2021
      %2023 = vmatmul.f32.gmra.mxu0 %v1565
      %v2024 = vpop.f32.mrf.mxu0
      %v2025 = vadd.f32 %v1933, %v2024
      %2026 = vmatmul.f32.gmra.mxu0 %v1568
      %v2027 = vpop.f32.mrf.mxu0
      %v2028 = vadd.f32 %v1936, %v2027
      %2029 = vmatmul.f32.gmra.mxu0 %v1571
      %v2030 = vpop.f32.mrf.mxu0
      %v2031 = vadd.f32 %v1939, %v2030
      %2032 = vmatmul.f32.gmra.mxu0 %v1574
      %v2033 = vpop.f32.mrf.mxu0
      %v2034 = vadd.f32 %v1942, %v2033
      %2035 = vmatmul.f32.gmra.mxu0 %v1577
      %v2036 = vpop.f32.mrf.mxu0
      %v2037 = vadd.f32 %v1945, %v2036
      %2038 = vmatmul.f32.gmra.mxu0 %v1580
      %v2039 = vpop.f32.mrf.mxu0
      %v2040 = vadd.f32 %v1948, %v2039
      %2041 = vmatmul.f32.gmra.mxu0 %v1583
      %v2042 = vpop.f32.mrf.mxu0
      %v2043 = vadd.f32 %v1951, %v2042
      %2044 = vmatmul.f32.gmra.mxu0 %v1586
      %v2045 = vpop.f32.mrf.mxu0
      %v2046 = vadd.f32 %v1954, %v2045
      %2047 = vdwg.mxu0
      %2048 = vst.msk [vmem:[%s224] sm:$0xff] %vm435, %v1974
      %2049 = vst.msk [vmem:[%s224 + $0x8] sm:$0xff] %vm435, %v1977
      %2050 = vst.msk [vmem:[%s224 + $0x10] sm:$0xff] %vm435, %v1980
      %2051 = vst.msk [vmem:[%s224 + $0x18] sm:$0xff] %vm435, %v1983
      %2052 = vst.msk [vmem:[%s224 + $0x20] sm:$0xff] %vm435, %v1986
      %2053 = vst.msk [vmem:[%s224 + $0x28] sm:$0xff] %vm435, %v1989
      %2054 = vst.msk [vmem:[%s224 + $0x30] sm:$0xff] %vm435, %v1992
      %2055 = vst.msk [vmem:[%s224 + $0x38] sm:$0xff] %vm435, %v1995
      %2056 = vst.msk [vmem:[%s224 + $0x40] sm:$0xff] %vm435, %v1998
      %2057 = vst.msk [vmem:[%s224 + $0x48] sm:$0xff] %vm435, %v2001
      %2058 = vst.msk [vmem:[%s224 + $0x50] sm:$0xff] %vm435, %v2004
      %2059 = vst.msk [vmem:[%s224 + $0x58] sm:$0xff] %vm435, %v2007
      %2060 = vst.msk [vmem:[%s224 + $0x60] sm:$0xff] %vm435, %v2010
      %2061 = vst.msk [vmem:[%s224 + $0x68] sm:$0xff] %vm435, %v2013
      %2062 = vst.msk [vmem:[%s224 + $0x70] sm:$0xff] %vm435, %v2016
      %2063 = vst.msk [vmem:[%s224 + $0x78] sm:$0xff] %vm435, %v2019
      %2064 = vst.msk [vmem:[%s224 + $0x80] sm:$0xff] %vm435, %v2022
      %2065 = vst.msk [vmem:[%s224 + $0x88] sm:$0xff] %vm435, %v2025
      %2066 = vst.msk [vmem:[%s224 + $0x90] sm:$0xff] %vm435, %v2028
      %2067 = vst.msk [vmem:[%s224 + $0x98] sm:$0xff] %vm435, %v2031
      %2068 = vst.msk [vmem:[%s224 + $0xa0] sm:$0xff] %vm435, %v2034
      %2069 = vst.msk [vmem:[%s224 + $0xa8] sm:$0xff] %vm435, %v2037
      %2070 = vst.msk [vmem:[%s224 + $0xb0] sm:$0xff] %vm435, %v2040
      %2071 = vst.msk [vmem:[%s224 + $0xb8] sm:$0xff] %vm435, %v2043
      %vm2072 = vcmask 519168
      %2073 = vst.msk [vmem:[%s224 + $0xc0] sm:$0xf] %vm2072, %v2046
      %p2074 = scmp.lt.s32.totalorder %s16, 1
      %s2075 = scalar_select %p2074, %s16, 1
      %s2076 = smul.addr %s2075, 25
      %s2077 = smul.addr %s2076, 8
      %s2078 = scalar_lea.vmem %s5, %s2077
      // Predicated region
      $region45: #{mynet_forward.1} parent=39 // pred_check
        %p2079 = pneg %p144
      $region46: #{mynet_forward.1} parent=39 // pred_check_branch
        %2081 = sbr.rel (%p2079) target = $region48
      $region47: #{mynet_forward.1} parent=39 // pred_region
        _
      $region48: #{mynet_forward.1} parent=39 // pred_fallthru
        _
    $region40: #{mynet_forward.1} parent=5 // pred_fallthru
      _
    %p2082 = scmp.le.s32.totalorder 2, %s11
    // Predicated region
    $region49: #{mynet_forward.1} parent=5 // pred_check
      %p2083 = pneg %p2082
    $region50: #{mynet_forward.1} parent=5 // pred_check_branch
      %2085 = sbr.rel (%p2083) target = $region52
    $region51: #{mynet_forward.1} parent=5 // pred_region
      %s2086 = ssub.s32 %s11, 2
      // Predicated region
      $region53: #{mynet_forward.1} parent=51 // pred_check
        %p2087 = pneg %p150
      $region54: #{mynet_forward.1} parent=51 // pred_check_branch
        %2089 = sbr.rel (%p2087) target = $region56
      $region55: #{mynet_forward.1} parent=51 // pred_region
        %p2090 = scmp.lt.s32.totalorder %s17, 1
        %s2091 = scalar_select %p2090, %s17, 1
        %s2092 = smul.addr %s2091, 25
        %s2093 = smul.addr %s2092, 8
        %s2094 = scalar_lea.vmem %s5, %s2093
      $region56: #{mynet_forward.1} parent=51 // pred_fallthru
        _
    $region52: #{mynet_forward.1} parent=5 // pred_fallthru
      _
  $region6: #{mynet_forward.1} parent=0 // loop_footer
    %s15 = sadd.s32 1, %s11
  $region7: #{mynet_forward.1} parent=0 // loop_footer_branch
    %10 = sbr.rel target = $region3
  $region8: #{mynet_forward.1} parent=0 // loop_exit
    _

</llo_original>
